<compile_context>
chip_gen: v7x
topology: tpu7x:2x2x1
jax: 0.10.0
libtpu: 0.0.40
codegen_flags: <defaults>
</compile_context>

<pallas_src>
import jax
import jax.numpy as jnp
from jax import lax
from jax.experimental import pallas as pl
from jax.experimental.pallas import tpu as pltpu

_BN_EPS = 1e-5
_ROW_PAD = 16  # pad packed-buffer rows so bf16 (16,128) sublane tiling stays aligned


def _make_fused_mlp_kernel(dims, batch):
    """Kernel: n_layers of (matmul -> BN(train) -> tanh), weights DMA'd manually.

    Ref order (no grid):
      x_ref                       (B, dims[0])             f32, VMEM
      p_hbm[l], l=0..n-1          (dims[l]+16, dims[l+1])  bf16, HBM (pl.ANY)
      o_ref                       (B, dims[-1])            f32, VMEM
      p_vmem[l], l=0..n-1         VMEM scratch matching p_hbm[l]
      sems                        DMA semaphores, shape (n_layers,)

    Packed buffer rows: [0:d_in] = W^T, row d_in = gamma, row d_in+1 = beta.
    """
    n_layers = len(dims) - 1
    inv_b = 1.0 / float(batch)

    def kernel(*refs):
        x_ref = refs[0]
        p_hbm = refs[1:1 + n_layers]
        o_ref = refs[1 + n_layers]
        p_vmem = refs[2 + n_layers:2 + 2 * n_layers]
        sems = refs[2 + 2 * n_layers]

        # Kick off every layer's weight DMA immediately; wait lazily per layer
        # so layer l+1's copy overlaps layer l's compute.
        copies = [
            pltpu.make_async_copy(p_hbm[l], p_vmem[l], sems.at[l])
            for l in range(n_layers)
        ]
        for cp in copies:
            cp.start()

        h = x_ref[...]  # f32 activations, stay resident in VMEM/vregs
        for l in range(n_layers):
            d_in = dims[l]
            copies[l].wait()
            buf = p_vmem[l]
            w = buf[0:d_in, :]  # bf16 (d_in, d_out)
            # Linear (bias omitted: cancelled exactly by the BN mean-subtract).
            y = jnp.dot(h.astype(jnp.bfloat16), w,
                        preferred_element_type=jnp.float32)
            # BatchNorm1d, training mode: one-pass moments, biased variance.
            s1 = jnp.sum(y, axis=0, keepdims=True)
            s2 = jnp.sum(y * y, axis=0, keepdims=True)
            mean = s1 * inv_b
            var = s2 * inv_b - mean * mean
            gamma = buf[d_in:d_in + 1, :].astype(jnp.float32)
            beta = buf[d_in + 1:d_in + 2, :].astype(jnp.float32)
            scale = gamma * lax.rsqrt(var + _BN_EPS)
            h = jnp.tanh((y - mean) * scale + beta)
        o_ref[...] = h.astype(o_ref.dtype)

    return kernel


def mlp_forward_fused(x, packed_params):
    """Run the whole MLP stack in a single fused, no-grid pallas_call.

    x: (B, D_0) float32
    packed_params: per layer, a bf16 (D_in + 16, D_out) buffer holding
                   [W^T ; gamma ; beta ; zero padding].
    """
    n_layers = len(packed_params)
    B = x.shape[0]
    dims = (int(x.shape[1]),) + tuple(int(p.shape[1]) for p in packed_params)
    d_final = dims[-1]

    in_specs = [pl.BlockSpec(memory_space=pltpu.MemorySpace.VMEM)]
    in_specs += [pl.BlockSpec(memory_space=pl.ANY) for _ in range(n_layers)]

    scratch_shapes = [pltpu.VMEM(tuple(p.shape), p.dtype) for p in packed_params]
    scratch_shapes.append(pltpu.SemaphoreType.DMA((n_layers,)))

    flops = 2 * B * sum(dims[l] * dims[l + 1] for l in range(n_layers))
    transcendentals = (B + 1) * sum(dims[1:])  # tanh per elem + rsqrt per feature
    bytes_accessed = (
        x.size * x.dtype.itemsize
        + sum(p.size * p.dtype.itemsize for p in packed_params)
        + B * d_final * 4
    )

    return pl.pallas_call(
        _make_fused_mlp_kernel(dims, B),
        out_shape=jax.ShapeDtypeStruct((B, d_final), x.dtype),
        in_specs=in_specs,
        out_specs=pl.BlockSpec(memory_space=pltpu.MemorySpace.VMEM),
        scratch_shapes=scratch_shapes,
        cost_estimate=pl.CostEstimate(
            flops=flops,
            transcendentals=transcendentals,
            bytes_accessed=bytes_accessed,
        ),
    )(x, *packed_params)


@jax.jit
def mlp_forward(x, packed_params):
    return mlp_forward_fused(x, packed_params)


def init_mlp_params(key, hidden_dim):
    """Deterministic init matching the PyTorch module's parameter shapes.

    Returns:
      packed_params: per layer, bf16 (d_in + 16, d_out) buffer holding
                     [W^T ; gamma ; beta ; pad] for the fused kernel
                     (bias dropped — cancelled by training-mode BN).
      ref_params:    per layer, (w, b, gamma, beta) in f32 for the reference.
    """
    packed_params = []
    ref_params = []
    for i in range(len(hidden_dim) - 1):
        d_in, d_out = hidden_dim[i], hidden_dim[i + 1]
        key, kw, kb, kg, kbe = jax.random.split(key, 5)
        # xavier-normal linear weight, stored transposed as (d_in, d_out)
        std = (2.0 / (d_in + d_out)) ** 0.5
        w = jax.random.normal(kw, (d_in, d_out), jnp.float32) * std
        b = jax.random.normal(kb, (d_out,), jnp.float32) * 0.01
        # BatchNorm affine params (nontrivial values to exercise the kernel).
        gamma = 1.0 + 0.1 * jax.random.normal(kg, (d_out,), jnp.float32)
        beta = 0.1 * jax.random.normal(kbe, (d_out,), jnp.float32)
        packed = jnp.zeros((d_in + _ROW_PAD, d_out), jnp.float32)
        packed = packed.at[:d_in].set(w)
        packed = packed.at[d_in].set(gamma)
        packed = packed.at[d_in + 1].set(beta)
        packed_params.append(packed.astype(jnp.bfloat16))
        ref_params.append((w, b, gamma, beta))
    return packed_params, ref_params


def _reference_forward(x, ref_params):
    # Pure-JAX f32 reference: Linear(+bias) + BatchNorm1d(train) + Tanh stack.
    for (w, b, gamma, beta) in ref_params:
        y = x @ w + b
        mean = jnp.mean(y, axis=0, keepdims=True)
        var = jnp.mean((y - mean) ** 2, axis=0, keepdims=True)
        xhat = (y - mean) / jnp.sqrt(var + _BN_EPS)
        x = jnp.tanh(xhat * gamma + beta)
    return x


if __name__ == "__main__":
    # Small shapes consistent with MLP(hidden_dim=[...]); B=128 amortizes the
    # fixed launch/DMA cost and fills the MXU LHS rows.
    hidden_dim = [256, 512, 128]
    B = 128

    key = jax.random.PRNGKey(0)
    key, kx = jax.random.split(key)
    x = jax.random.normal(kx, (B, hidden_dim[0]), jnp.float32)
    packed_params, ref_params = init_mlp_params(key, hidden_dim)

    out = mlp_forward(x, packed_params)
    out = jax.block_until_ready(out)

    ref = _reference_forward(x, ref_params)
    assert out.shape == (B, hidden_dim[-1]), out.shape
    # bf16 weights/operands => relax tolerance vs. the f32 reference.
    assert jnp.allclose(out, ref, atol=3e-2, rtol=3e-2), "mismatch vs reference"

    print("KERNEL_OK")
</pallas_src>

<mosaic_0001>
module attributes {stable_mosaic.version = 11 : i64} {
  func.func @kernel(%arg0: memref<128x256xf32, #tpu.memory_space<vmem>>, %arg1: memref<272x512xbf16, #tpu.memory_space<any>>, %arg2: memref<528x128xbf16, #tpu.memory_space<any>>, %arg3: memref<128x128xf32, #tpu.memory_space<vmem>>, %arg4: memref<272x512xbf16, #tpu.memory_space<vmem>>, %arg5: memref<528x128xbf16, #tpu.memory_space<vmem>>, %arg6: memref<2x!tpu.dma_semaphore, #tpu.memory_space<semaphore_mem>>) attributes {dimension_semantics = [], scalar_prefetch = 0 : i64, scratch_operands = 3 : i64, tpu.core_type = #tpu.core_type<tc>} {
    %c0_i32 = arith.constant 0 : i32
    %0 = tpu.memref_slice %arg6[%c0_i32] : memref<2x!tpu.dma_semaphore, #tpu.memory_space<semaphore_mem>> -> memref<1x!tpu.dma_semaphore, #tpu.memory_space<semaphore_mem>>
    %1 = tpu.memref_squeeze %0 : memref<1x!tpu.dma_semaphore, #tpu.memory_space<semaphore_mem>> -> memref<!tpu.dma_semaphore, #tpu.memory_space<semaphore_mem>>
    tpu.enqueue_dma source(%arg1 : memref<272x512xbf16, #tpu.memory_space<any>>) target(%arg4 : memref<272x512xbf16, #tpu.memory_space<vmem>>) target_semaphore(%1 : memref<!tpu.dma_semaphore, #tpu.memory_space<semaphore_mem>>)
    %c1_i32 = arith.constant 1 : i32
    %2 = tpu.memref_slice %arg6[%c1_i32] : memref<2x!tpu.dma_semaphore, #tpu.memory_space<semaphore_mem>> -> memref<1x!tpu.dma_semaphore, #tpu.memory_space<semaphore_mem>>
    %3 = tpu.memref_squeeze %2 : memref<1x!tpu.dma_semaphore, #tpu.memory_space<semaphore_mem>> -> memref<!tpu.dma_semaphore, #tpu.memory_space<semaphore_mem>>
    tpu.enqueue_dma source(%arg2 : memref<528x128xbf16, #tpu.memory_space<any>>) target(%arg5 : memref<528x128xbf16, #tpu.memory_space<vmem>>) target_semaphore(%3 : memref<!tpu.dma_semaphore, #tpu.memory_space<semaphore_mem>>)
    %c0 = arith.constant 0 : index
    %c0_0 = arith.constant 0 : index
    %4 = vector.load %arg0[%c0, %c0_0] : memref<128x256xf32, #tpu.memory_space<vmem>>, vector<128x256xf32>
    %c0_i32_1 = arith.constant 0 : i32
    %5 = tpu.memref_slice %arg6[%c0_i32_1] : memref<2x!tpu.dma_semaphore, #tpu.memory_space<semaphore_mem>> -> memref<1x!tpu.dma_semaphore, #tpu.memory_space<semaphore_mem>>
    %6 = tpu.memref_squeeze %5 : memref<1x!tpu.dma_semaphore, #tpu.memory_space<semaphore_mem>> -> memref<!tpu.dma_semaphore, #tpu.memory_space<semaphore_mem>>
    tpu.wait_dma2 semaphore(%6 : memref<!tpu.dma_semaphore, #tpu.memory_space<semaphore_mem>>) src(%arg1 : memref<272x512xbf16, #tpu.memory_space<any>>) dst(%arg4 : memref<272x512xbf16, #tpu.memory_space<vmem>>)
    %c0_2 = arith.constant 0 : index
    %c0_3 = arith.constant 0 : index
    %7 = vector.load %arg4[%c0_2, %c0_3] : memref<272x512xbf16, #tpu.memory_space<vmem>>, vector<256x512xbf16>
    %8 = arith.truncf %4 : vector<128x256xf32> to vector<128x256xbf16>
    %cst = arith.constant dense<0.000000e+00> : vector<128x512xf32>
    %9 = tpu.matmul %8, %7, %cst {dimension_numbers = #tpu.dot_dimension_numbers<[1], [0], [0], [1], [0, 0, 1, 1], [], []>} : vector<128x256xbf16>, vector<256x512xbf16>, vector<128x512xf32> -> vector<128x512xf32>
    %cst_4 = arith.constant dense<0.000000e+00> : vector<512xf32>
    %10 = vector.multi_reduction <add>, %9, %cst_4 [0] : vector<128x512xf32> to vector<512xf32>
    %11 = vector.shape_cast %10 : vector<512xf32> to vector<1x512xf32>
    %12 = arith.mulf %9, %9 : vector<128x512xf32>
    %cst_5 = arith.constant dense<0.000000e+00> : vector<512xf32>
    %13 = vector.multi_reduction <add>, %12, %cst_5 [0] : vector<128x512xf32> to vector<512xf32>
    %14 = vector.shape_cast %13 : vector<512xf32> to vector<1x512xf32>
    %cst_6 = arith.constant 7.812500e-03 : f32
    %15 = vector.broadcast %cst_6 : f32 to vector<1x512xf32>
    %16 = arith.mulf %11, %15 : vector<1x512xf32>
    %cst_7 = arith.constant 7.812500e-03 : f32
    %17 = vector.broadcast %cst_7 : f32 to vector<1x512xf32>
    %18 = arith.mulf %14, %17 : vector<1x512xf32>
    %19 = arith.mulf %16, %16 : vector<1x512xf32>
    %20 = arith.subf %18, %19 : vector<1x512xf32>
    %c256 = arith.constant 256 : index
    %c0_8 = arith.constant 0 : index
    %21 = vector.load %arg4[%c256, %c0_8] : memref<272x512xbf16, #tpu.memory_space<vmem>>, vector<1x512xbf16>
    %22 = arith.extf %21 : vector<1x512xbf16> to vector<1x512xf32>
    %c257 = arith.constant 257 : index
    %c0_9 = arith.constant 0 : index
    %23 = vector.load %arg4[%c257, %c0_9] : memref<272x512xbf16, #tpu.memory_space<vmem>>, vector<1x512xbf16>
    %24 = arith.extf %23 : vector<1x512xbf16> to vector<1x512xf32>
    %cst_10 = arith.constant 9.99999974E-6 : f32
    %25 = vector.broadcast %cst_10 : f32 to vector<1x512xf32>
    %26 = arith.addf %20, %25 : vector<1x512xf32>
    %27 = math.rsqrt %26 : vector<1x512xf32>
    %28 = arith.mulf %22, %27 : vector<1x512xf32>
    %29 = vector.broadcast %16 : vector<1x512xf32> to vector<128x512xf32>
    %30 = arith.subf %9, %29 : vector<128x512xf32>
    %31 = vector.broadcast %28 : vector<1x512xf32> to vector<128x512xf32>
    %32 = arith.mulf %30, %31 : vector<128x512xf32>
    %33 = vector.broadcast %24 : vector<1x512xf32> to vector<128x512xf32>
    %34 = arith.addf %32, %33 : vector<128x512xf32>
    %35 = math.tanh %34 : vector<128x512xf32>
    %c1_i32_11 = arith.constant 1 : i32
    %36 = tpu.memref_slice %arg6[%c1_i32_11] : memref<2x!tpu.dma_semaphore, #tpu.memory_space<semaphore_mem>> -> memref<1x!tpu.dma_semaphore, #tpu.memory_space<semaphore_mem>>
    %37 = tpu.memref_squeeze %36 : memref<1x!tpu.dma_semaphore, #tpu.memory_space<semaphore_mem>> -> memref<!tpu.dma_semaphore, #tpu.memory_space<semaphore_mem>>
    tpu.wait_dma2 semaphore(%37 : memref<!tpu.dma_semaphore, #tpu.memory_space<semaphore_mem>>) src(%arg2 : memref<528x128xbf16, #tpu.memory_space<any>>) dst(%arg5 : memref<528x128xbf16, #tpu.memory_space<vmem>>)
    %c0_12 = arith.constant 0 : index
    %c0_13 = arith.constant 0 : index
    %38 = vector.load %arg5[%c0_12, %c0_13] : memref<528x128xbf16, #tpu.memory_space<vmem>>, vector<512x128xbf16>
    %39 = arith.truncf %35 : vector<128x512xf32> to vector<128x512xbf16>
    %cst_14 = arith.constant dense<0.000000e+00> : vector<128x128xf32>
    %40 = tpu.matmul %39, %38, %cst_14 {dimension_numbers = #tpu.dot_dimension_numbers<[1], [0], [0], [1], [0, 0, 1, 1], [], []>} : vector<128x512xbf16>, vector<512x128xbf16>, vector<128x128xf32> -> vector<128x128xf32>
    %cst_15 = arith.constant dense<0.000000e+00> : vector<128xf32>
    %41 = vector.multi_reduction <add>, %40, %cst_15 [0] : vector<128x128xf32> to vector<128xf32>
    %42 = vector.shape_cast %41 : vector<128xf32> to vector<1x128xf32>
    %43 = arith.mulf %40, %40 : vector<128x128xf32>
    %cst_16 = arith.constant dense<0.000000e+00> : vector<128xf32>
    %44 = vector.multi_reduction <add>, %43, %cst_16 [0] : vector<128x128xf32> to vector<128xf32>
    %45 = vector.shape_cast %44 : vector<128xf32> to vector<1x128xf32>
    %cst_17 = arith.constant 7.812500e-03 : f32
    %46 = vector.broadcast %cst_17 : f32 to vector<1x128xf32>
    %47 = arith.mulf %42, %46 : vector<1x128xf32>
    %cst_18 = arith.constant 7.812500e-03 : f32
    %48 = vector.broadcast %cst_18 : f32 to vector<1x128xf32>
    %49 = arith.mulf %45, %48 : vector<1x128xf32>
    %50 = arith.mulf %47, %47 : vector<1x128xf32>
    %51 = arith.subf %49, %50 : vector<1x128xf32>
    %c512 = arith.constant 512 : index
    %c0_19 = arith.constant 0 : index
    %52 = vector.load %arg5[%c512, %c0_19] : memref<528x128xbf16, #tpu.memory_space<vmem>>, vector<1x128xbf16>
    %53 = arith.extf %52 : vector<1x128xbf16> to vector<1x128xf32>
    %c513 = arith.constant 513 : index
    %c0_20 = arith.constant 0 : index
    %54 = vector.load %arg5[%c513, %c0_20] : memref<528x128xbf16, #tpu.memory_space<vmem>>, vector<1x128xbf16>
    %55 = arith.extf %54 : vector<1x128xbf16> to vector<1x128xf32>
    %cst_21 = arith.constant 9.99999974E-6 : f32
    %56 = vector.broadcast %cst_21 : f32 to vector<1x128xf32>
    %57 = arith.addf %51, %56 : vector<1x128xf32>
    %58 = math.rsqrt %57 : vector<1x128xf32>
    %59 = arith.mulf %53, %58 : vector<1x128xf32>
    %60 = vector.broadcast %47 : vector<1x128xf32> to vector<128x128xf32>
    %61 = arith.subf %40, %60 : vector<128x128xf32>
    %62 = vector.broadcast %59 : vector<1x128xf32> to vector<128x128xf32>
    %63 = arith.mulf %61, %62 : vector<128x128xf32>
    %64 = vector.broadcast %55 : vector<1x128xf32> to vector<128x128xf32>
    %65 = arith.addf %63, %64 : vector<128x128xf32>
    %66 = math.tanh %65 : vector<128x128xf32>
    %c0_22 = arith.constant 0 : index
    %c0_23 = arith.constant 0 : index
    %67 = vector.load %arg3[%c0_22, %c0_23] : memref<128x128xf32, #tpu.memory_space<vmem>>, vector<128x128xf32>
    tpu.vector_store %arg3[%c0_22, %c0_23], %66 {strides = array<i32>} : memref<128x128xf32, #tpu.memory_space<vmem>>, vector<128x128xf32>,
    return
  }
}

</mosaic_0001>

<llo_original>
// kernel: mlp_forward.1
$region0: #{mlp_forward.1}
  #allocation0 [shape = 'u32[]', space=smem, size = 0x4, offset = 0x4, fixed_abs, tag = 'smem constant byte address 0x4 - core index']
  #allocation1 [shape = 'u32[144,128]{1,0:T(1,128)}', space=vmem, size = 0x12000, scoped, tag = 'internal scratch']
  #allocation2 [shape = 'bf16[272,512]{1,0:T(16,128)(2,1)}', space=vmem, size = 0x44000, scoped, tag = 'scratch operand']
  #allocation3 [shape = 'bf16[528,128]{1,0:T(16,128)(2,1)}', space=vmem, size = 0x21000, scoped, tag = 'scratch operand']
  #allocation4 [shape = 's32[2]{0}', space=sflag, size = 0x8, scoped, tag = 'scratch operand']
  #allocation9 [shape = 's32[]', space=sflag, size = 0x4, offset = 0, fixed_abs, tag = 'sflag constant byte address 0x0 - dummy sync flag']
  #allocation11 [shape = 's32[]', space=sflag, size = 0x4, offset = 0, fixed_abs, tag = 'sflag constant byte address 0x0 - dummy sync flag']
  #allocation12 [shape = 's32[]', space=sflag, size = 0x4, offset = 0, fixed_abs, tag = 'sflag constant byte address 0x0 - dummy sync flag']
  #allocation13 [shape = 'u32[]', space=smem, size = 0x4, offset = 0x44, fixed_abs, tag = 'smem constant byte address 0x44 - assertion arg 0']
  #allocation14 [shape = 'u32[]', space=smem, size = 0x4, offset = 0x48, fixed_abs, tag = 'smem constant byte address 0x48 - assertion arg 1']
  %s0 = inlined_call_operand.hbm [shape: f32[128,256], index: 0, kind: input, shape index: {}]
  %s1 = inlined_call_operand.hbm [shape: bf16[272,512], index: 1, kind: input, shape index: {}]
  %s2 = inlined_call_operand.hbm [shape: bf16[528,128], index: 2, kind: input, shape index: {}]
  %s3 = inlined_call_operand.hbm [shape: f32[128,128], index: 3, kind: output, shape index: {}]
  %s4 = sld [smem:[#allocation0]]
  $region22: #{mlp_forward.1} parent=0
    _
  %s6 = ssub.s32 1, %s4
  %s7 = scalar_select 0, %s6, %s4
  $region1: #{mlp_forward.1} parent=0
    #allocation5 [shape = 'u8[131072]{0}', space=vmem, size = 0x20000, scoped, tag = 'input window, operand 0, single buffered']
    #allocation6 [shape = 's32[1]{0}', space=sflag, size = 0x4, scoped, tag = 'scoped memory for mlp_forward.1']
    #allocation7 [shape = 's32[1]{0}', space=sflag, size = 0x4, scoped, tag = 'scoped memory for mlp_forward.1']
    #allocation8 [shape = 'u8[65536]{0}', space=vmem, size = 0x10000, scoped, tag = 'output window, operand 0, single buffered']
    #allocation10 [shape = 'u32[9]{0}', space=smem, size = 0x24, scoped, tag = 'DMA stride descriptor']
    %8 = vsyncpa [#allocation6], 0
    %9 = vsyncpa [#allocation7], 0
    // Predicated region
    $region2: #{mlp_forward.1} parent=1 // pred_check
      _
    $region3: #{mlp_forward.1} parent=1 // pred_check_branch
      %11 = sbr.rel (0) target = $region5
    $region4: #{mlp_forward.1} parent=1 // pred_region
      %s13 = ssub.s32 4096, 4096
      %14 = vsyncadd [#allocation6], %s13
      %s15 = sshll.u32 [#allocation5], 4
      %s16 = int_to_ptr.vmem [resolvable:$true] %s15
      %21 = dma.hbm_to_vmem [thread:$0]  %s0, 4096, %s16, [#allocation6], 256, 256, 16
    $region5: #{mlp_forward.1} parent=1 // pred_fallthru
      _
    // Predicated region
    $region6: #{mlp_forward.1} parent=1 // pred_check
      _
    $region7: #{mlp_forward.1} parent=1 // pred_check_branch
      %23 = sbr.rel (0) target = $region9
    $region8: #{mlp_forward.1} parent=1 // pred_region
      %24 = dma.done [#allocation6], 4096
    $region9: #{mlp_forward.1} parent=1 // pred_fallthru
      _
    %s27 = sshll.u32 1, 14
    %s28 = sxor.u32 4294967295, %s27
    %s30 = sld [smem:[#allocation0]]
    %s31 = sadd.s32 2, %s30
    %s33 = sshll.u32 7, 26
    %s34 = sxor.u32 4294967295, %s33
    %s35 = sand.u32 0, %s34
    %s36 = sshll.u32 %s31, 26
    %s37 = sor.u32 %s35, %s36
    %s38 = sshll.u32 [#allocation2], 4
    %s39 = int_to_ptr.vmem [resolvable:$true] %s38
    %42 = sst [smem:[#allocation10]] 512
    %s43 = scalar_lea.smem [#allocation10], 1
    %44 = sst [smem:[%s43]] 512
    %s45 = scalar_lea.smem [#allocation10], 2
    %46 = sst [smem:[%s45]] 4
    %s47 = scalar_lea.smem [#allocation10], 3
    %48 = sst [smem:[%s47]] 64
    %s49 = scalar_lea.smem [#allocation10], 4
    %50 = sst [smem:[%s49]] 128
    %s51 = scalar_lea.smem [#allocation10], 5
    %52 = sst [smem:[%s51]] 2
    %s53 = scalar_lea.smem [#allocation10], 6
    %54 = sst [smem:[%s53]] 256
    %s55 = scalar_lea.smem [#allocation10], 7
    %56 = sst [smem:[%s55]] 64
    %s57 = scalar_lea.smem [#allocation10], 8
    %58 = sst [smem:[%s57]] 4
    %60 = dma.general %s1, 8704, %s39, [#allocation4], [#allocation9], [#allocation10], %s37, 0
    %s61 = scalar_lea.sflag [#allocation4], 1
    // Predicated region
    $region10: #{mlp_forward.1} parent=1 // pred_check
      _
    $region11: #{mlp_forward.1} parent=1 // pred_check_branch
      %63 = sbr.rel target = $region13
    $region12: #{mlp_forward.1} parent=1 // pred_region
      %64 = sst [smem:[#allocation13]] [#allocation12]
      %65 = sst [smem:[#allocation14]] [#allocation11]
    $region13: #{mlp_forward.1} parent=1 // pred_fallthru
      _
    %67 = shalt.err (0)
    %s69 = sshll.u32 [#allocation3], 4
    %s70 = int_to_ptr.vmem [resolvable:$true] %s69
    %72 = dma.hbm_to_vmem [thread:$0]  %s2, 4224, %s70, %s61
    %v73 = vld [vmem:[#allocation5] sm:$0xff]
    %v74 = vld [vmem:[#allocation5 + $0x8] sm:$0xff]
    %v75 = vld [vmem:[#allocation5 + $0x10] sm:$0xff]
    %v76 = vld [vmem:[#allocation5 + $0x18] sm:$0xff]
    %v77 = vld [vmem:[#allocation5 + $0x20] sm:$0xff]
    %v78 = vld [vmem:[#allocation5 + $0x28] sm:$0xff]
    %v79 = vld [vmem:[#allocation5 + $0x30] sm:$0xff]
    %v80 = vld [vmem:[#allocation5 + $0x38] sm:$0xff]
    %v81 = vld [vmem:[#allocation5 + $0x40] sm:$0xff]
    %v82 = vld [vmem:[#allocation5 + $0x48] sm:$0xff]
    %v83 = vld [vmem:[#allocation5 + $0x50] sm:$0xff]
    %v84 = vld [vmem:[#allocation5 + $0x58] sm:$0xff]
    %v85 = vld [vmem:[#allocation5 + $0x60] sm:$0xff]
    %v86 = vld [vmem:[#allocation5 + $0x68] sm:$0xff]
    %v87 = vld [vmem:[#allocation5 + $0x70] sm:$0xff]
    %v88 = vld [vmem:[#allocation5 + $0x78] sm:$0xff]
    %v89 = vld [vmem:[#allocation5 + $0x80] sm:$0xff]
    %v90 = vld [vmem:[#allocation5 + $0x88] sm:$0xff]
    %v91 = vld [vmem:[#allocation5 + $0x90] sm:$0xff]
    %v92 = vld [vmem:[#allocation5 + $0x98] sm:$0xff]
    %v93 = vld [vmem:[#allocation5 + $0xa0] sm:$0xff]
    %v94 = vld [vmem:[#allocation5 + $0xa8] sm:$0xff]
    %v95 = vld [vmem:[#allocation5 + $0xb0] sm:$0xff]
    %v96 = vld [vmem:[#allocation5 + $0xb8] sm:$0xff]
    %v97 = vld [vmem:[#allocation5 + $0xc0] sm:$0xff]
    %v98 = vld [vmem:[#allocation5 + $0xc8] sm:$0xff]
    %v99 = vld [vmem:[#allocation5 + $0xd0] sm:$0xff]
    %v100 = vld [vmem:[#allocation5 + $0xd8] sm:$0xff]
    %v101 = vld [vmem:[#allocation5 + $0xe0] sm:$0xff]
    %v102 = vld [vmem:[#allocation5 + $0xe8] sm:$0xff]
    %v103 = vld [vmem:[#allocation5 + $0xf0] sm:$0xff]
    %v104 = vld [vmem:[#allocation5 + $0xf8] sm:$0xff]
    %s105 = smul.u32 4, 34
    %s106 = smul.u32 %s105, 4
    %s107 = sshll.u32 %s106, 4
    %108 = dma.done [#allocation4], %s107
    %v109 = vld [vmem:[#allocation2] sm:$0xff]
    %v110 = vld [vmem:[#allocation2 + $0x8] sm:$0xff]
    %v111 = vld [vmem:[#allocation2 + $0x10] sm:$0xff]
    %v112 = vld [vmem:[#allocation2 + $0x18] sm:$0xff]
    %v113 = vld [vmem:[#allocation2 + $0x20] sm:$0xff]
    %v114 = vld [vmem:[#allocation2 + $0x28] sm:$0xff]
    %v115 = vld [vmem:[#allocation2 + $0x30] sm:$0xff]
    %v116 = vld [vmem:[#allocation2 + $0x38] sm:$0xff]
    %v117 = vld [vmem:[#allocation2 + $0x40] sm:$0xff]
    %v118 = vld [vmem:[#allocation2 + $0x48] sm:$0xff]
    %v119 = vld [vmem:[#allocation2 + $0x50] sm:$0xff]
    %v120 = vld [vmem:[#allocation2 + $0x58] sm:$0xff]
    %v121 = vld [vmem:[#allocation2 + $0x60] sm:$0xff]
    %v122 = vld [vmem:[#allocation2 + $0x68] sm:$0xff]
    %v123 = vld [vmem:[#allocation2 + $0x70] sm:$0xff]
    %v124 = vld [vmem:[#allocation2 + $0x78] sm:$0xff]
    %v125 = vld [vmem:[#allocation2 + $0x80] sm:$0xff]
    %v126 = vld [vmem:[#allocation2 + $0x88] sm:$0xff]
    %v127 = vld [vmem:[#allocation2 + $0x90] sm:$0xff]
    %v128 = vld [vmem:[#allocation2 + $0x98] sm:$0xff]
    %v129 = vld [vmem:[#allocation2 + $0xa0] sm:$0xff]
    %v130 = vld [vmem:[#allocation2 + $0xa8] sm:$0xff]
    %v131 = vld [vmem:[#allocation2 + $0xb0] sm:$0xff]
    %v132 = vld [vmem:[#allocation2 + $0xb8] sm:$0xff]
    %v133 = vld [vmem:[#allocation2 + $0xc0] sm:$0xff]
    %v134 = vld [vmem:[#allocation2 + $0xc8] sm:$0xff]
    %v135 = vld [vmem:[#allocation2 + $0xd0] sm:$0xff]
    %v136 = vld [vmem:[#allocation2 + $0xd8] sm:$0xff]
    %v137 = vld [vmem:[#allocation2 + $0xe0] sm:$0xff]
    %v138 = vld [vmem:[#allocation2 + $0xe8] sm:$0xff]
    %v139 = vld [vmem:[#allocation2 + $0xf0] sm:$0xff]
    %v140 = vld [vmem:[#allocation2 + $0xf8] sm:$0xff]
    %v141 = vld [vmem:[#allocation2 + $0x100] sm:$0xff]
    %v142 = vld [vmem:[#allocation2 + $0x108] sm:$0xff]
    %v143 = vld [vmem:[#allocation2 + $0x110] sm:$0xff]
    %v144 = vld [vmem:[#allocation2 + $0x118] sm:$0xff]
    %v145 = vld [vmem:[#allocation2 + $0x120] sm:$0xff]
    %v146 = vld [vmem:[#allocation2 + $0x128] sm:$0xff]
    %v147 = vld [vmem:[#allocation2 + $0x130] sm:$0xff]
    %v148 = vld [vmem:[#allocation2 + $0x138] sm:$0xff]
    %v149 = vld [vmem:[#allocation2 + $0x140] sm:$0xff]
    %v150 = vld [vmem:[#allocation2 + $0x148] sm:$0xff]
    %v151 = vld [vmem:[#allocation2 + $0x150] sm:$0xff]
    %v152 = vld [vmem:[#allocation2 + $0x158] sm:$0xff]
    %v153 = vld [vmem:[#allocation2 + $0x160] sm:$0xff]
    %v154 = vld [vmem:[#allocation2 + $0x168] sm:$0xff]
    %v155 = vld [vmem:[#allocation2 + $0x170] sm:$0xff]
    %v156 = vld [vmem:[#allocation2 + $0x178] sm:$0xff]
    %v157 = vld [vmem:[#allocation2 + $0x180] sm:$0xff]
    %v158 = vld [vmem:[#allocation2 + $0x188] sm:$0xff]
    %v159 = vld [vmem:[#allocation2 + $0x190] sm:$0xff]
    %v160 = vld [vmem:[#allocation2 + $0x198] sm:$0xff]
    %v161 = vld [vmem:[#allocation2 + $0x1a0] sm:$0xff]
    %v162 = vld [vmem:[#allocation2 + $0x1a8] sm:$0xff]
    %v163 = vld [vmem:[#allocation2 + $0x1b0] sm:$0xff]
    %v164 = vld [vmem:[#allocation2 + $0x1b8] sm:$0xff]
    %v165 = vld [vmem:[#allocation2 + $0x1c0] sm:$0xff]
    %v166 = vld [vmem:[#allocation2 + $0x1c8] sm:$0xff]
    %v167 = vld [vmem:[#allocation2 + $0x1d0] sm:$0xff]
    %v168 = vld [vmem:[#allocation2 + $0x1d8] sm:$0xff]
    %v169 = vld [vmem:[#allocation2 + $0x1e0] sm:$0xff]
    %v170 = vld [vmem:[#allocation2 + $0x1e8] sm:$0xff]
    %v171 = vld [vmem:[#allocation2 + $0x1f0] sm:$0xff]
    %v172 = vld [vmem:[#allocation2 + $0x1f8] sm:$0xff]
    %v173 = vpack.c.bf16 %v75, %v73
    %v174 = vpack.c.bf16 %v76, %v74
    %v175 = vpack.c.bf16 %v79, %v77
    %v176 = vpack.c.bf16 %v80, %v78
    %v177 = vpack.c.bf16 %v83, %v81
    %v178 = vpack.c.bf16 %v84, %v82
    %v179 = vpack.c.bf16 %v87, %v85
    %v180 = vpack.c.bf16 %v88, %v86
    %v181 = vpack.c.bf16 %v91, %v89
    %v182 = vpack.c.bf16 %v92, %v90
    %v183 = vpack.c.bf16 %v95, %v93
    %v184 = vpack.c.bf16 %v96, %v94
    %v185 = vpack.c.bf16 %v99, %v97
    %v186 = vpack.c.bf16 %v100, %v98
    %v187 = vpack.c.bf16 %v103, %v101
    %v188 = vpack.c.bf16 %v104, %v102
    %189 = vmatprep.subr.bf16.mxu0 %v110
    %190 = vmatpush1.bf16.msra.mxu0 %v109
    %191 = vmatprep.subr.bf16.mxu0 %v114
    %192 = vmatpush1.bf16.msra.mxu0 %v113
    %193 = vmatprep.subr.bf16.mxu0 %v118
    %194 = vmatpush1.bf16.msra.mxu0 %v117
    %195 = vmatprep.subr.bf16.mxu0 %v122
    %196 = vmatpush1.bf16.msra.mxu0 %v121
    %197 = vmatprep.subr.bf16.mxu0 %v126
    %198 = vmatpush1.bf16.msra.mxu0 %v125
    %199 = vmatprep.subr.bf16.mxu0 %v130
    %200 = vmatpush1.bf16.msra.mxu0 %v129
    %201 = vmatprep.subr.bf16.mxu0 %v134
    %202 = vmatpush1.bf16.msra.mxu0 %v133
    %203 = vmatprep.subr.bf16.mxu0 %v138
    %204 = vmatpush1.bf16.msra.mxu0 %v137
    %205 = vmatprep.subr.bf16.mxu0 %v142
    %206 = vmatpush1.bf16.msra.mxu0 %v141
    %207 = vmatprep.subr.bf16.mxu0 %v146
    %208 = vmatpush1.bf16.msra.mxu0 %v145
    %209 = vmatprep.subr.bf16.mxu0 %v150
    %210 = vmatpush1.bf16.msra.mxu0 %v149
    %211 = vmatprep.subr.bf16.mxu0 %v154
    %212 = vmatpush1.bf16.msra.mxu0 %v153
    %213 = vmatprep.subr.bf16.mxu0 %v158
    %214 = vmatpush1.bf16.msra.mxu0 %v157
    %215 = vmatprep.subr.bf16.mxu0 %v162
    %216 = vmatpush1.bf16.msra.mxu0 %v161
    %217 = vmatprep.subr.bf16.mxu0 %v166
    %218 = vmatpush1.bf16.msra.mxu0 %v165
    %219 = vmatprep.subr.bf16.mxu0 %v170
    %220 = vmatpush1.bf16.msra.mxu0 %v169
    %221 = vmatprep.mubr.bf16.mxu0 %v174
    %222 = vmatmul.mubr.bf16.gmra.mrb[0].mxu0 %v173
    %v223 = vpop.f32.mrb[0].mxu0
    %v224 = vadd.f32 0.0, %v223
    %v225 = vpop.f32.mrb[0].mxu0
    %v226 = vadd.f32 0.0, %v225
    %v227 = vpop.f32.mrb[0].mxu0
    %v228 = vadd.f32 0.0, %v227
    %v229 = vpop.f32.mrb[0].mxu0
    %v230 = vadd.f32 0.0, %v229
    %231 = vmatprep.mubr.bf16.mxu0 %v176
    %232 = vmatmul.mubr.bf16.gmra.mrb[0].mxu0 %v175
    %v233 = vpop.f32.mrb[0].mxu0
    %v234 = vadd.f32 0.0, %v233
    %v235 = vpop.f32.mrb[0].mxu0
    %v236 = vadd.f32 0.0, %v235
    %v237 = vpop.f32.mrb[0].mxu0
    %v238 = vadd.f32 0.0, %v237
    %v239 = vpop.f32.mrb[0].mxu0
    %v240 = vadd.f32 0.0, %v239
    %241 = vmatprep.mubr.bf16.mxu0 %v178
    %242 = vmatmul.mubr.bf16.gmra.mrb[0].mxu0 %v177
    %v243 = vpop.f32.mrb[0].mxu0
    %v244 = vadd.f32 0.0, %v243
    %v245 = vpop.f32.mrb[0].mxu0
    %v246 = vadd.f32 0.0, %v245
    %v247 = vpop.f32.mrb[0].mxu0
    %v248 = vadd.f32 0.0, %v247
    %v249 = vpop.f32.mrb[0].mxu0
    %v250 = vadd.f32 0.0, %v249
    %251 = vmatprep.mubr.bf16.mxu0 %v180
    %252 = vmatmul.mubr.bf16.gmra.mrb[0].mxu0 %v179
    %v253 = vpop.f32.mrb[0].mxu0
    %v254 = vadd.f32 0.0, %v253
    %v255 = vpop.f32.mrb[0].mxu0
    %v256 = vadd.f32 0.0, %v255
    %v257 = vpop.f32.mrb[0].mxu0
    %v258 = vadd.f32 0.0, %v257
    %v259 = vpop.f32.mrb[0].mxu0
    %v260 = vadd.f32 0.0, %v259
    %261 = vmatprep.mubr.bf16.mxu0 %v182
    %262 = vmatmul.mubr.bf16.gmra.mrb[0].mxu0 %v181
    %v263 = vpop.f32.mrb[0].mxu0
    %v264 = vadd.f32 0.0, %v263
    %v265 = vpop.f32.mrb[0].mxu0
    %v266 = vadd.f32 0.0, %v265
    %v267 = vpop.f32.mrb[0].mxu0
    %v268 = vadd.f32 0.0, %v267
    %v269 = vpop.f32.mrb[0].mxu0
    %v270 = vadd.f32 0.0, %v269
    %271 = vmatprep.mubr.bf16.mxu0 %v184
    %272 = vmatmul.mubr.bf16.gmra.mrb[0].mxu0 %v183
    %v273 = vpop.f32.mrb[0].mxu0
    %v274 = vadd.f32 0.0, %v273
    %v275 = vpop.f32.mrb[0].mxu0
    %v276 = vadd.f32 0.0, %v275
    %v277 = vpop.f32.mrb[0].mxu0
    %v278 = vadd.f32 0.0, %v277
    %v279 = vpop.f32.mrb[0].mxu0
    %v280 = vadd.f32 0.0, %v279
    %281 = vmatprep.mubr.bf16.mxu0 %v186
    %282 = vmatmul.mubr.bf16.gmra.mrb[0].mxu0 %v185
    %v283 = vpop.f32.mrb[0].mxu0
    %v284 = vadd.f32 0.0, %v283
    %v285 = vpop.f32.mrb[0].mxu0
    %v286 = vadd.f32 0.0, %v285
    %v287 = vpop.f32.mrb[0].mxu0
    %v288 = vadd.f32 0.0, %v287
    %v289 = vpop.f32.mrb[0].mxu0
    %v290 = vadd.f32 0.0, %v289
    %291 = vmatprep.mubr.bf16.mxu0 %v188
    %292 = vmatmul.mubr.bf16.gmra.mrb[0].mxu0 %v187
    %v293 = vpop.f32.mrb[0].mxu0
    %v294 = vadd.f32 0.0, %v293
    %v295 = vpop.f32.mrb[0].mxu0
    %v296 = vadd.f32 0.0, %v295
    %v297 = vpop.f32.mrb[0].mxu0
    %v298 = vadd.f32 0.0, %v297
    %v299 = vpop.f32.mrb[0].mxu0
    %v300 = vadd.f32 0.0, %v299
    %301 = vdwg.mxu0
    %302 = vmatprep.subr.bf16.mxu0 %v112
    %303 = vmatpush1.bf16.msra.mxu0 %v111
    %304 = vmatprep.subr.bf16.mxu0 %v116
    %305 = vmatpush1.bf16.msra.mxu0 %v115
    %306 = vmatprep.subr.bf16.mxu0 %v120
    %307 = vmatpush1.bf16.msra.mxu0 %v119
    %308 = vmatprep.subr.bf16.mxu0 %v124
    %309 = vmatpush1.bf16.msra.mxu0 %v123
    %310 = vmatprep.subr.bf16.mxu0 %v128
    %311 = vmatpush1.bf16.msra.mxu0 %v127
    %312 = vmatprep.subr.bf16.mxu0 %v132
    %313 = vmatpush1.bf16.msra.mxu0 %v131
    %314 = vmatprep.subr.bf16.mxu0 %v136
    %315 = vmatpush1.bf16.msra.mxu0 %v135
    %316 = vmatprep.subr.bf16.mxu0 %v140
    %317 = vmatpush1.bf16.msra.mxu0 %v139
    %318 = vmatprep.subr.bf16.mxu0 %v144
    %319 = vmatpush1.bf16.msra.mxu0 %v143
    %320 = vmatprep.subr.bf16.mxu0 %v148
    %321 = vmatpush1.bf16.msra.mxu0 %v147
    %322 = vmatprep.subr.bf16.mxu0 %v152
    %323 = vmatpush1.bf16.msra.mxu0 %v151
    %324 = vmatprep.subr.bf16.mxu0 %v156
    %325 = vmatpush1.bf16.msra.mxu0 %v155
    %326 = vmatprep.subr.bf16.mxu0 %v160
    %327 = vmatpush1.bf16.msra.mxu0 %v159
    %328 = vmatprep.subr.bf16.mxu0 %v164
    %329 = vmatpush1.bf16.msra.mxu0 %v163
    %330 = vmatprep.subr.bf16.mxu0 %v168
    %331 = vmatpush1.bf16.msra.mxu0 %v167
    %332 = vmatprep.subr.bf16.mxu0 %v172
    %333 = vmatpush1.bf16.msra.mxu0 %v171
    %334 = vmatprep.mubr.bf16.mxu0 %v174
    %335 = vmatmul.mubr.bf16.gmra.mrb[0].mxu0 %v173
    %v336 = vpop.f32.mrb[0].mxu0
    %v337 = vadd.f32 0.0, %v336
    %v338 = vpop.f32.mrb[0].mxu0
    %v339 = vadd.f32 0.0, %v338
    %v340 = vpop.f32.mrb[0].mxu0
    %v341 = vadd.f32 0.0, %v340
    %v342 = vpop.f32.mrb[0].mxu0
    %v343 = vadd.f32 0.0, %v342
    %344 = vmatprep.mubr.bf16.mxu0 %v176
    %345 = vmatmul.mubr.bf16.gmra.mrb[0].mxu0 %v175
    %v346 = vpop.f32.mrb[0].mxu0
    %v347 = vadd.f32 0.0, %v346
    %v348 = vpop.f32.mrb[0].mxu0
    %v349 = vadd.f32 0.0, %v348
    %v350 = vpop.f32.mrb[0].mxu0
    %v351 = vadd.f32 0.0, %v350
    %v352 = vpop.f32.mrb[0].mxu0
    %v353 = vadd.f32 0.0, %v352
    %354 = vmatprep.mubr.bf16.mxu0 %v178
    %355 = vmatmul.mubr.bf16.gmra.mrb[0].mxu0 %v177
    %v356 = vpop.f32.mrb[0].mxu0
    %v357 = vadd.f32 0.0, %v356
    %v358 = vpop.f32.mrb[0].mxu0
    %v359 = vadd.f32 0.0, %v358
    %v360 = vpop.f32.mrb[0].mxu0
    %v361 = vadd.f32 0.0, %v360
    %v362 = vpop.f32.mrb[0].mxu0
    %v363 = vadd.f32 0.0, %v362
    %364 = vmatprep.mubr.bf16.mxu0 %v180
    %365 = vmatmul.mubr.bf16.gmra.mrb[0].mxu0 %v179
    %v366 = vpop.f32.mrb[0].mxu0
    %v367 = vadd.f32 0.0, %v366
    %v368 = vpop.f32.mrb[0].mxu0
    %v369 = vadd.f32 0.0, %v368
    %v370 = vpop.f32.mrb[0].mxu0
    %v371 = vadd.f32 0.0, %v370
    %v372 = vpop.f32.mrb[0].mxu0
    %v373 = vadd.f32 0.0, %v372
    %374 = vmatprep.mubr.bf16.mxu0 %v182
    %375 = vmatmul.mubr.bf16.gmra.mrb[0].mxu0 %v181
    %v376 = vpop.f32.mrb[0].mxu0
    %v377 = vadd.f32 0.0, %v376
    %v378 = vpop.f32.mrb[0].mxu0
    %v379 = vadd.f32 0.0, %v378
    %v380 = vpop.f32.mrb[0].mxu0
    %v381 = vadd.f32 0.0, %v380
    %v382 = vpop.f32.mrb[0].mxu0
    %v383 = vadd.f32 0.0, %v382
    %384 = vmatprep.mubr.bf16.mxu0 %v184
    %385 = vmatmul.mubr.bf16.gmra.mrb[0].mxu0 %v183
    %v386 = vpop.f32.mrb[0].mxu0
    %v387 = vadd.f32 0.0, %v386
    %v388 = vpop.f32.mrb[0].mxu0
    %v389 = vadd.f32 0.0, %v388
    %v390 = vpop.f32.mrb[0].mxu0
    %v391 = vadd.f32 0.0, %v390
    %v392 = vpop.f32.mrb[0].mxu0
    %v393 = vadd.f32 0.0, %v392
    %394 = vmatprep.mubr.bf16.mxu0 %v186
    %395 = vmatmul.mubr.bf16.gmra.mrb[0].mxu0 %v185
    %v396 = vpop.f32.mrb[0].mxu0
    %v397 = vadd.f32 0.0, %v396
    %v398 = vpop.f32.mrb[0].mxu0
    %v399 = vadd.f32 0.0, %v398
    %v400 = vpop.f32.mrb[0].mxu0
    %v401 = vadd.f32 0.0, %v400
    %v402 = vpop.f32.mrb[0].mxu0
    %v403 = vadd.f32 0.0, %v402
    %404 = vmatprep.mubr.bf16.mxu0 %v188
    %405 = vmatmul.mubr.bf16.gmra.mrb[0].mxu0 %v187
    %v406 = vpop.f32.mrb[0].mxu0
    %v407 = vadd.f32 0.0, %v406
    %v408 = vpop.f32.mrb[0].mxu0
    %v409 = vadd.f32 0.0, %v408
    %v410 = vpop.f32.mrb[0].mxu0
    %v411 = vadd.f32 0.0, %v410
    %v412 = vpop.f32.mrb[0].mxu0
    %v413 = vadd.f32 0.0, %v412
    %414 = vdwg.mxu0
    %v415 = vadd.f32 %v224, %v228
    %v416 = vadd.f32 %v415, %v234
    %v417 = vadd.f32 %v416, %v238
    %v418 = vadd.f32 %v417, %v244
    %v419 = vadd.f32 %v418, %v248
    %v420 = vadd.f32 %v419, %v254
    %v421 = vadd.f32 %v420, %v258
    %v422 = vadd.f32 %v421, %v264
    %v423 = vadd.f32 %v422, %v268
    %v424 = vadd.f32 %v423, %v274
    %v425 = vadd.f32 %v424, %v278
    %v426 = vadd.f32 %v425, %v284
    %v427 = vadd.f32 %v426, %v288
    %v428 = vadd.f32 %v427, %v294
    %v429 = vadd.f32 %v428, %v298
    %v430 = vrot.slane %v429, 4
    %v431 = vadd.f32 %v429, %v430
    %v432 = vrot.slane %v431, 2
    %v433 = vadd.f32 %v431, %v432
    %v434 = vrot.slane %v433, 1
    %v435 = vadd.f32 %v433, %v434
    %v436 = vadd.f32 %v226, %v230
    %v437 = vadd.f32 %v436, %v236
    %v438 = vadd.f32 %v437, %v240
    %v439 = vadd.f32 %v438, %v246
    %v440 = vadd.f32 %v439, %v250
    %v441 = vadd.f32 %v440, %v256
    %v442 = vadd.f32 %v441, %v260
    %v443 = vadd.f32 %v442, %v266
    %v444 = vadd.f32 %v443, %v270
    %v445 = vadd.f32 %v444, %v276
    %v446 = vadd.f32 %v445, %v280
    %v447 = vadd.f32 %v446, %v286
    %v448 = vadd.f32 %v447, %v290
    %v449 = vadd.f32 %v448, %v296
    %v450 = vadd.f32 %v449, %v300
    %v451 = vrot.slane %v450, 4
    %v452 = vadd.f32 %v450, %v451
    %v453 = vrot.slane %v452, 2
    %v454 = vadd.f32 %v452, %v453
    %v455 = vrot.slane %v454, 1
    %v456 = vadd.f32 %v454, %v455
    %v457 = vadd.f32 %v337, %v341
    %v458 = vadd.f32 %v457, %v347
    %v459 = vadd.f32 %v458, %v351
    %v460 = vadd.f32 %v459, %v357
    %v461 = vadd.f32 %v460, %v361
    %v462 = vadd.f32 %v461, %v367
    %v463 = vadd.f32 %v462, %v371
    %v464 = vadd.f32 %v463, %v377
    %v465 = vadd.f32 %v464, %v381
    %v466 = vadd.f32 %v465, %v387
    %v467 = vadd.f32 %v466, %v391
    %v468 = vadd.f32 %v467, %v397
    %v469 = vadd.f32 %v468, %v401
    %v470 = vadd.f32 %v469, %v407
    %v471 = vadd.f32 %v470, %v411
    %v472 = vrot.slane %v471, 4
    %v473 = vadd.f32 %v471, %v472
    %v474 = vrot.slane %v473, 2
    %v475 = vadd.f32 %v473, %v474
    %v476 = vrot.slane %v475, 1
    %v477 = vadd.f32 %v475, %v476
    %v478 = vadd.f32 %v339, %v343
    %v479 = vadd.f32 %v478, %v349
    %v480 = vadd.f32 %v479, %v353
    %v481 = vadd.f32 %v480, %v359
    %v482 = vadd.f32 %v481, %v363
    %v483 = vadd.f32 %v482, %v369
    %v484 = vadd.f32 %v483, %v373
    %v485 = vadd.f32 %v484, %v379
    %v486 = vadd.f32 %v485, %v383
    %v487 = vadd.f32 %v486, %v389
    %v488 = vadd.f32 %v487, %v393
    %v489 = vadd.f32 %v488, %v399
    %v490 = vadd.f32 %v489, %v403
    %v491 = vadd.f32 %v490, %v409
    %v492 = vadd.f32 %v491, %v413
    %v493 = vrot.slane %v492, 4
    %v494 = vadd.f32 %v492, %v493
    %v495 = vrot.slane %v494, 2
    %v496 = vadd.f32 %v494, %v495
    %v497 = vrot.slane %v496, 1
    %v498 = vadd.f32 %v496, %v497
    %v499 = vmul.f32 %v224, %v224
    %v500 = vmul.f32 %v226, %v226
    %v501 = vmul.f32 %v337, %v337
    %v502 = vmul.f32 %v339, %v339
    %v503 = vmul.f32 %v228, %v228
    %v504 = vmul.f32 %v230, %v230
    %v505 = vmul.f32 %v341, %v341
    %v506 = vmul.f32 %v343, %v343
    %v507 = vmul.f32 %v234, %v234
    %v508 = vmul.f32 %v236, %v236
    %v509 = vmul.f32 %v347, %v347
    %v510 = vmul.f32 %v349, %v349
    %v511 = vmul.f32 %v238, %v238
    %v512 = vmul.f32 %v240, %v240
    %v513 = vmul.f32 %v351, %v351
    %v514 = vmul.f32 %v353, %v353
    %v515 = vmul.f32 %v244, %v244
    %v516 = vmul.f32 %v246, %v246
    %v517 = vmul.f32 %v357, %v357
    %v518 = vmul.f32 %v359, %v359
    %v519 = vmul.f32 %v248, %v248
    %v520 = vmul.f32 %v250, %v250
    %v521 = vmul.f32 %v361, %v361
    %v522 = vmul.f32 %v363, %v363
    %v523 = vmul.f32 %v254, %v254
    %v524 = vmul.f32 %v256, %v256
    %v525 = vmul.f32 %v367, %v367
    %v526 = vmul.f32 %v369, %v369
    %v527 = vmul.f32 %v258, %v258
    %v528 = vmul.f32 %v260, %v260
    %v529 = vmul.f32 %v371, %v371
    %v530 = vmul.f32 %v373, %v373
    %v531 = vmul.f32 %v264, %v264
    %v532 = vmul.f32 %v266, %v266
    %v533 = vmul.f32 %v377, %v377
    %v534 = vmul.f32 %v379, %v379
    %v535 = vmul.f32 %v268, %v268
    %v536 = vmul.f32 %v270, %v270
    %v537 = vmul.f32 %v381, %v381
    %v538 = vmul.f32 %v383, %v383
    %v539 = vmul.f32 %v274, %v274
    %v540 = vmul.f32 %v276, %v276
    %v541 = vmul.f32 %v387, %v387
    %v542 = vmul.f32 %v389, %v389
    %v543 = vmul.f32 %v278, %v278
    %v544 = vmul.f32 %v280, %v280
    %v545 = vmul.f32 %v391, %v391
    %v546 = vmul.f32 %v393, %v393
    %v547 = vmul.f32 %v284, %v284
    %v548 = vmul.f32 %v286, %v286
    %v549 = vmul.f32 %v397, %v397
    %v550 = vmul.f32 %v399, %v399
    %v551 = vmul.f32 %v288, %v288
    %v552 = vmul.f32 %v290, %v290
    %v553 = vmul.f32 %v401, %v401
    %v554 = vmul.f32 %v403, %v403
    %v555 = vmul.f32 %v294, %v294
    %v556 = vmul.f32 %v296, %v296
    %v557 = vmul.f32 %v407, %v407
    %v558 = vmul.f32 %v409, %v409
    %v559 = vmul.f32 %v298, %v298
    %v560 = vmul.f32 %v300, %v300
    %v561 = vmul.f32 %v411, %v411
    %v562 = vmul.f32 %v413, %v413
    %v563 = vadd.f32 %v499, %v503
    %v564 = vadd.f32 %v563, %v507
    %v565 = vadd.f32 %v564, %v511
    %v566 = vadd.f32 %v565, %v515
    %v567 = vadd.f32 %v566, %v519
    %v568 = vadd.f32 %v567, %v523
    %v569 = vadd.f32 %v568, %v527
    %v570 = vadd.f32 %v569, %v531
    %v571 = vadd.f32 %v570, %v535
    %v572 = vadd.f32 %v571, %v539
    %v573 = vadd.f32 %v572, %v543
    %v574 = vadd.f32 %v573, %v547
    %v575 = vadd.f32 %v574, %v551
    %v576 = vadd.f32 %v575, %v555
    %v577 = vadd.f32 %v576, %v559
    %v578 = vrot.slane %v577, 4
    %v579 = vadd.f32 %v577, %v578
    %v580 = vrot.slane %v579, 2
    %v581 = vadd.f32 %v579, %v580
    %v582 = vrot.slane %v581, 1
    %v583 = vadd.f32 %v581, %v582
    %v584 = vadd.f32 %v500, %v504
    %v585 = vadd.f32 %v584, %v508
    %v586 = vadd.f32 %v585, %v512
    %v587 = vadd.f32 %v586, %v516
    %v588 = vadd.f32 %v587, %v520
    %v589 = vadd.f32 %v588, %v524
    %v590 = vadd.f32 %v589, %v528
    %v591 = vadd.f32 %v590, %v532
    %v592 = vadd.f32 %v591, %v536
    %v593 = vadd.f32 %v592, %v540
    %v594 = vadd.f32 %v593, %v544
    %v595 = vadd.f32 %v594, %v548
    %v596 = vadd.f32 %v595, %v552
    %v597 = vadd.f32 %v596, %v556
    %v598 = vadd.f32 %v597, %v560
    %v599 = vrot.slane %v598, 4
    %v600 = vadd.f32 %v598, %v599
    %v601 = vrot.slane %v600, 2
    %v602 = vadd.f32 %v600, %v601
    %v603 = vrot.slane %v602, 1
    %v604 = vadd.f32 %v602, %v603
    %v605 = vadd.f32 %v501, %v505
    %v606 = vadd.f32 %v605, %v509
    %v607 = vadd.f32 %v606, %v513
    %v608 = vadd.f32 %v607, %v517
    %v609 = vadd.f32 %v608, %v521
    %v610 = vadd.f32 %v609, %v525
    %v611 = vadd.f32 %v610, %v529
    %v612 = vadd.f32 %v611, %v533
    %v613 = vadd.f32 %v612, %v537
    %v614 = vadd.f32 %v613, %v541
    %v615 = vadd.f32 %v614, %v545
    %v616 = vadd.f32 %v615, %v549
    %v617 = vadd.f32 %v616, %v553
    %v618 = vadd.f32 %v617, %v557
    %v619 = vadd.f32 %v618, %v561
    %v620 = vrot.slane %v619, 4
    %v621 = vadd.f32 %v619, %v620
    %v622 = vrot.slane %v621, 2
    %v623 = vadd.f32 %v621, %v622
    %v624 = vrot.slane %v623, 1
    %v625 = vadd.f32 %v623, %v624
    %v626 = vadd.f32 %v502, %v506
    %v627 = vadd.f32 %v626, %v510
    %v628 = vadd.f32 %v627, %v514
    %v629 = vadd.f32 %v628, %v518
    %v630 = vadd.f32 %v629, %v522
    %v631 = vadd.f32 %v630, %v526
    %v632 = vadd.f32 %v631, %v530
    %v633 = vadd.f32 %v632, %v534
    %v634 = vadd.f32 %v633, %v538
    %v635 = vadd.f32 %v634, %v542
    %v636 = vadd.f32 %v635, %v546
    %v637 = vadd.f32 %v636, %v550
    %v638 = vadd.f32 %v637, %v554
    %v639 = vadd.f32 %v638, %v558
    %v640 = vadd.f32 %v639, %v562
    %v641 = vrot.slane %v640, 4
    %v642 = vadd.f32 %v640, %v641
    %v643 = vrot.slane %v642, 2
    %v644 = vadd.f32 %v642, %v643
    %v645 = vrot.slane %v644, 1
    %v646 = vadd.f32 %v644, %v645
    %v647 = vmul.f32 %v435, 0.0078125
    %v648 = vmul.f32 %v456, 0.0078125
    %v649 = vmul.f32 %v477, 0.0078125
    %v650 = vmul.f32 %v498, 0.0078125
    %v651 = vmul.f32 %v583, 0.0078125
    %v652 = vmul.f32 %v604, 0.0078125
    %v653 = vmul.f32 %v625, 0.0078125
    %v654 = vmul.f32 %v646, 0.0078125
    %v655 = vmul.f32 %v647, %v647
    %v656 = vmul.f32 %v648, %v648
    %v657 = vmul.f32 %v649, %v649
    %v658 = vmul.f32 %v650, %v650
    %v659 = vsub.f32 %v651, %v655
    %v660 = vsub.f32 %v652, %v656
    %v661 = vsub.f32 %v653, %v657
    %v662 = vsub.f32 %v654, %v658
    %v663 = vld [vmem:[#allocation2 + $0x200] sm:$0x1]
    %v664 = vld [vmem:[#allocation2 + $0x208] sm:$0x1]
    %v665 = vld [vmem:[#allocation2 + $0x210] sm:$0x1]
    %v666 = vld [vmem:[#allocation2 + $0x218] sm:$0x1]
    %v667 = vunpack.c.l.bf16 %v663
    %v668 = vunpack.c.l.bf16 %v664
    %v669 = vunpack.c.l.bf16 %v665
    %v670 = vunpack.c.l.bf16 %v666
    %v671 = vadd.f32 %v659, 1e-05
    %v672 = vadd.f32 %v660, 1e-05
    %v673 = vadd.f32 %v661, 1e-05
    %v674 = vadd.f32 %v662, 1e-05
    %v675 = vrsqrt.pop %v671
    %v676 = vrsqrt.pop %v672
    %v677 = vrsqrt.pop %v673
    %v678 = vrsqrt.pop %v674
    %v679 = vmul.f32 %v667, %v675
    %v680 = vmul.f32 %v668, %v676
    %v681 = vmul.f32 %v669, %v677
    %v682 = vmul.f32 %v670, %v678
    %v683 = vsub.f32 %v224, %v647
    %v684 = vsub.f32 %v226, %v648
    %v685 = vsub.f32 %v337, %v649
    %v686 = vsub.f32 %v339, %v650
    %v687 = vsub.f32 %v228, %v647
    %v688 = vsub.f32 %v230, %v648
    %v689 = vsub.f32 %v341, %v649
    %v690 = vsub.f32 %v343, %v650
    %v691 = vsub.f32 %v234, %v647
    %v692 = vsub.f32 %v236, %v648
    %v693 = vsub.f32 %v347, %v649
    %v694 = vsub.f32 %v349, %v650
    %v695 = vsub.f32 %v238, %v647
    %v696 = vsub.f32 %v240, %v648
    %v697 = vsub.f32 %v351, %v649
    %v698 = vsub.f32 %v353, %v650
    %v699 = vsub.f32 %v244, %v647
    %v700 = vsub.f32 %v246, %v648
    %v701 = vsub.f32 %v357, %v649
    %v702 = vsub.f32 %v359, %v650
    %v703 = vsub.f32 %v248, %v647
    %v704 = vsub.f32 %v250, %v648
    %v705 = vsub.f32 %v361, %v649
    %v706 = vsub.f32 %v363, %v650
    %v707 = vsub.f32 %v254, %v647
    %v708 = vsub.f32 %v256, %v648
    %v709 = vsub.f32 %v367, %v649
    %v710 = vsub.f32 %v369, %v650
    %v711 = vsub.f32 %v258, %v647
    %v712 = vsub.f32 %v260, %v648
    %v713 = vsub.f32 %v371, %v649
    %v714 = vsub.f32 %v373, %v650
    %v715 = vsub.f32 %v264, %v647
    %v716 = vsub.f32 %v266, %v648
    %v717 = vsub.f32 %v377, %v649
    %v718 = vsub.f32 %v379, %v650
    %v719 = vsub.f32 %v268, %v647
    %v720 = vsub.f32 %v270, %v648
    %v721 = vsub.f32 %v381, %v649
    %v722 = vsub.f32 %v383, %v650
    %v723 = vsub.f32 %v274, %v647
    %v724 = vsub.f32 %v276, %v648
    %v725 = vsub.f32 %v387, %v649
    %v726 = vsub.f32 %v389, %v650
    %v727 = vsub.f32 %v278, %v647
    %v728 = vsub.f32 %v280, %v648
    %v729 = vsub.f32 %v391, %v649
    %v730 = vsub.f32 %v393, %v650
    %v731 = vsub.f32 %v284, %v647
    %v732 = vsub.f32 %v286, %v648
    %v733 = vsub.f32 %v397, %v649
    %v734 = vsub.f32 %v399, %v650
    %v735 = vsub.f32 %v288, %v647
    %v736 = vsub.f32 %v290, %v648
    %v737 = vsub.f32 %v401, %v649
    %v738 = vsub.f32 %v403, %v650
    %v739 = vsub.f32 %v294, %v647
    %v740 = vsub.f32 %v296, %v648
    %v741 = vsub.f32 %v407, %v649
    %v742 = vsub.f32 %v409, %v650
    %v743 = vsub.f32 %v298, %v647
    %v744 = vsub.f32 %v300, %v648
    %v745 = vsub.f32 %v411, %v649
    %v746 = vsub.f32 %v413, %v650
    %v747 = vlaneseq
    %v748 = vshrl.u32 %v747, 7
    %v749 = vsub.s32 0, %v748
    %v750 = vrot.slane %v679, %v749
    %v751 = vlaneseq
    %v752 = vshrl.u32 %v751, 7
    %v753 = vsub.s32 0, %v752
    %v754 = vrot.slane %v680, %v753
    %v755 = vlaneseq
    %v756 = vshrl.u32 %v755, 7
    %v757 = vsub.s32 0, %v756
    %v758 = vrot.slane %v681, %v757
    %v759 = vlaneseq
    %v760 = vshrl.u32 %v759, 7
    %v761 = vsub.s32 0, %v760
    %v762 = vrot.slane %v682, %v761
    %v763 = vmul.f32 %v683, %v750
    %v764 = vmul.f32 %v684, %v754
    %v765 = vmul.f32 %v685, %v758
    %v766 = vmul.f32 %v686, %v762
    %v767 = vmul.f32 %v687, %v750
    %v768 = vmul.f32 %v688, %v754
    %v769 = vmul.f32 %v689, %v758
    %v770 = vmul.f32 %v690, %v762
    %v771 = vmul.f32 %v691, %v750
    %v772 = vmul.f32 %v692, %v754
    %v773 = vmul.f32 %v693, %v758
    %v774 = vmul.f32 %v694, %v762
    %v775 = vmul.f32 %v695, %v750
    %v776 = vmul.f32 %v696, %v754
    %v777 = vmul.f32 %v697, %v758
    %v778 = vmul.f32 %v698, %v762
    %v779 = vmul.f32 %v699, %v750
    %v780 = vmul.f32 %v700, %v754
    %v781 = vmul.f32 %v701, %v758
    %v782 = vmul.f32 %v702, %v762
    %v783 = vmul.f32 %v703, %v750
    %v784 = vmul.f32 %v704, %v754
    %v785 = vmul.f32 %v705, %v758
    %v786 = vmul.f32 %v706, %v762
    %v787 = vmul.f32 %v707, %v750
    %v788 = vmul.f32 %v708, %v754
    %v789 = vmul.f32 %v709, %v758
    %v790 = vmul.f32 %v710, %v762
    %v791 = vmul.f32 %v711, %v750
    %v792 = vmul.f32 %v712, %v754
    %v793 = vmul.f32 %v713, %v758
    %v794 = vmul.f32 %v714, %v762
    %v795 = vmul.f32 %v715, %v750
    %v796 = vmul.f32 %v716, %v754
    %v797 = vmul.f32 %v717, %v758
    %v798 = vmul.f32 %v718, %v762
    %v799 = vmul.f32 %v719, %v750
    %v800 = vmul.f32 %v720, %v754
    %v801 = vmul.f32 %v721, %v758
    %v802 = vmul.f32 %v722, %v762
    %v803 = vmul.f32 %v723, %v750
    %v804 = vmul.f32 %v724, %v754
    %v805 = vmul.f32 %v725, %v758
    %v806 = vmul.f32 %v726, %v762
    %v807 = vmul.f32 %v727, %v750
    %v808 = vmul.f32 %v728, %v754
    %v809 = vmul.f32 %v729, %v758
    %v810 = vmul.f32 %v730, %v762
    %v811 = vmul.f32 %v731, %v750
    %v812 = vmul.f32 %v732, %v754
    %v813 = vmul.f32 %v733, %v758
    %v814 = vmul.f32 %v734, %v762
    %v815 = vmul.f32 %v735, %v750
    %v816 = vmul.f32 %v736, %v754
    %v817 = vmul.f32 %v737, %v758
    %v818 = vmul.f32 %v738, %v762
    %v819 = vmul.f32 %v739, %v750
    %v820 = vmul.f32 %v740, %v754
    %v821 = vmul.f32 %v741, %v758
    %v822 = vmul.f32 %v742, %v762
    %v823 = vmul.f32 %v743, %v750
    %v824 = vmul.f32 %v744, %v754
    %v825 = vmul.f32 %v745, %v758
    %v826 = vmul.f32 %v746, %v762
    %v827 = vlaneseq
    %v828 = vshrl.u32 %v827, 7
    %v829 = vsub.s32 1, %v828
    %v830 = vrot.slane %v667, %v829
    %v831 = vlaneseq
    %v832 = vshrl.u32 %v831, 7
    %v833 = vsub.s32 1, %v832
    %v834 = vrot.slane %v668, %v833
    %v835 = vlaneseq
    %v836 = vshrl.u32 %v835, 7
    %v837 = vsub.s32 1, %v836
    %v838 = vrot.slane %v669, %v837
    %v839 = vlaneseq
    %v840 = vshrl.u32 %v839, 7
    %v841 = vsub.s32 1, %v840
    %v842 = vrot.slane %v670, %v841
    %v843 = vadd.f32 %v763, %v830
    %v844 = vadd.f32 %v764, %v834
    %v845 = vadd.f32 %v765, %v838
    %v846 = vadd.f32 %v766, %v842
    %v847 = vadd.f32 %v767, %v830
    %v848 = vadd.f32 %v768, %v834
    %v849 = vadd.f32 %v769, %v838
    %v850 = vadd.f32 %v770, %v842
    %v851 = vadd.f32 %v771, %v830
    %v852 = vadd.f32 %v772, %v834
    %v853 = vadd.f32 %v773, %v838
    %v854 = vadd.f32 %v774, %v842
    %v855 = vadd.f32 %v775, %v830
    %v856 = vadd.f32 %v776, %v834
    %v857 = vadd.f32 %v777, %v838
    %v858 = vadd.f32 %v778, %v842
    %v859 = vadd.f32 %v779, %v830
    %v860 = vadd.f32 %v780, %v834
    %v861 = vadd.f32 %v781, %v838
    %v862 = vadd.f32 %v782, %v842
    %v863 = vadd.f32 %v783, %v830
    %v864 = vadd.f32 %v784, %v834
    %v865 = vadd.f32 %v785, %v838
    %v866 = vadd.f32 %v786, %v842
    %v867 = vadd.f32 %v787, %v830
    %v868 = vadd.f32 %v788, %v834
    %v869 = vadd.f32 %v789, %v838
    %v870 = vadd.f32 %v790, %v842
    %v871 = vadd.f32 %v791, %v830
    %v872 = vadd.f32 %v792, %v834
    %v873 = vadd.f32 %v793, %v838
    %v874 = vadd.f32 %v794, %v842
    %v875 = vadd.f32 %v795, %v830
    %v876 = vadd.f32 %v796, %v834
    %v877 = vadd.f32 %v797, %v838
    %v878 = vadd.f32 %v798, %v842
    %v879 = vadd.f32 %v799, %v830
    %v880 = vadd.f32 %v800, %v834
    %v881 = vadd.f32 %v801, %v838
    %v882 = vadd.f32 %v802, %v842
    %v883 = vadd.f32 %v803, %v830
    %v884 = vadd.f32 %v804, %v834
    %v885 = vadd.f32 %v805, %v838
    %v886 = vadd.f32 %v806, %v842
    %v887 = vadd.f32 %v807, %v830
    %v888 = vadd.f32 %v808, %v834
    %v889 = vadd.f32 %v809, %v838
    %v890 = vadd.f32 %v810, %v842
    %v891 = vadd.f32 %v811, %v830
    %v892 = vadd.f32 %v812, %v834
    %v893 = vadd.f32 %v813, %v838
    %v894 = vadd.f32 %v814, %v842
    %v895 = vadd.f32 %v815, %v830
    %v896 = vadd.f32 %v816, %v834
    %v897 = vadd.f32 %v817, %v838
    %v898 = vadd.f32 %v818, %v842
    %v899 = vadd.f32 %v819, %v830
    %v900 = vadd.f32 %v820, %v834
    %v901 = vadd.f32 %v821, %v838
    %v902 = vadd.f32 %v822, %v842
    %v903 = vadd.f32 %v823, %v830
    %v904 = vadd.f32 %v824, %v834
    %v905 = vadd.f32 %v825, %v838
    %v906 = vadd.f32 %v826, %v842
    %v907 = vtanh.pop %v843
    %v908 = vtanh.pop %v844
    %v909 = vtanh.pop %v845
    %v910 = vtanh.pop %v846
    %v911 = vtanh.pop %v847
    %v912 = vtanh.pop %v848
    %v913 = vtanh.pop %v849
    %v914 = vtanh.pop %v850
    %v915 = vtanh.pop %v851
    %v916 = vtanh.pop %v852
    %v917 = vtanh.pop %v853
    %v918 = vtanh.pop %v854
    %v919 = vtanh.pop %v855
    %v920 = vtanh.pop %v856
    %v921 = vtanh.pop %v857
    %v922 = vtanh.pop %v858
    %v923 = vtanh.pop %v859
    %v924 = vtanh.pop %v860
    %v925 = vtanh.pop %v861
    %v926 = vtanh.pop %v862
    %v927 = vtanh.pop %v863
    %v928 = vtanh.pop %v864
    %v929 = vtanh.pop %v865
    %v930 = vtanh.pop %v866
    %v931 = vtanh.pop %v867
    %v932 = vtanh.pop %v868
    %v933 = vtanh.pop %v869
    %v934 = vtanh.pop %v870
    %v935 = vtanh.pop %v871
    %v936 = vtanh.pop %v872
    %v937 = vtanh.pop %v873
    %v938 = vtanh.pop %v874
    %v939 = vtanh.pop %v875
    %v940 = vtanh.pop %v876
    %v941 = vtanh.pop %v877
    %v942 = vtanh.pop %v878
    %v943 = vtanh.pop %v879
    %v944 = vtanh.pop %v880
    %v945 = vtanh.pop %v881
    %v946 = vtanh.pop %v882
    %v947 = vtanh.pop %v883
    %v948 = vtanh.pop %v884
    %v949 = vtanh.pop %v885
    %v950 = vtanh.pop %v886
    %v951 = vtanh.pop %v887
    %v952 = vtanh.pop %v888
    %v953 = vtanh.pop %v889
    %v954 = vtanh.pop %v890
    %v955 = vtanh.pop %v891
    %v956 = vtanh.pop %v892
    %v957 = vtanh.pop %v893
    %v958 = vtanh.pop %v894
    %v959 = vtanh.pop %v895
    %v960 = vtanh.pop %v896
    %v961 = vtanh.pop %v897
    %v962 = vtanh.pop %v898
    %v963 = vtanh.pop %v899
    %v964 = vtanh.pop %v900
    %v965 = vtanh.pop %v901
    %v966 = vtanh.pop %v902
    %v967 = vtanh.pop %v903
    %v968 = vtanh.pop %v904
    %v969 = vtanh.pop %v905
    %v970 = vtanh.pop %v906
    %s971 = smul.u32 4, 66
    %s972 = smul.u32 %s971, 1
    %s973 = sshll.u32 %s972, 4
    %974 = dma.done %s61, %s973
    %v975 = vld [vmem:[#allocation3] sm:$0xff]
    %v976 = vld [vmem:[#allocation3 + $0x8] sm:$0xff]
    %v977 = vld [vmem:[#allocation3 + $0x10] sm:$0xff]
    %v978 = vld [vmem:[#allocation3 + $0x18] sm:$0xff]
    %v979 = vld [vmem:[#allocation3 + $0x20] sm:$0xff]
    %v980 = vld [vmem:[#allocation3 + $0x28] sm:$0xff]
    %v981 = vld [vmem:[#allocation3 + $0x30] sm:$0xff]
    %v982 = vld [vmem:[#allocation3 + $0x38] sm:$0xff]
    %v983 = vld [vmem:[#allocation3 + $0x40] sm:$0xff]
    %v984 = vld [vmem:[#allocation3 + $0x48] sm:$0xff]
    %v985 = vld [vmem:[#allocation3 + $0x50] sm:$0xff]
    %v986 = vld [vmem:[#allocation3 + $0x58] sm:$0xff]
    %v987 = vld [vmem:[#allocation3 + $0x60] sm:$0xff]
    %v988 = vld [vmem:[#allocation3 + $0x68] sm:$0xff]
    %v989 = vld [vmem:[#allocation3 + $0x70] sm:$0xff]
    %v990 = vld [vmem:[#allocation3 + $0x78] sm:$0xff]
    %v991 = vld [vmem:[#allocation3 + $0x80] sm:$0xff]
    %v992 = vld [vmem:[#allocation3 + $0x88] sm:$0xff]
    %v993 = vld [vmem:[#allocation3 + $0x90] sm:$0xff]
    %v994 = vld [vmem:[#allocation3 + $0x98] sm:$0xff]
    %v995 = vld [vmem:[#allocation3 + $0xa0] sm:$0xff]
    %v996 = vld [vmem:[#allocation3 + $0xa8] sm:$0xff]
    %v997 = vld [vmem:[#allocation3 + $0xb0] sm:$0xff]
    %v998 = vld [vmem:[#allocation3 + $0xb8] sm:$0xff]
    %v999 = vld [vmem:[#allocation3 + $0xc0] sm:$0xff]
    %v1000 = vld [vmem:[#allocation3 + $0xc8] sm:$0xff]
    %v1001 = vld [vmem:[#allocation3 + $0xd0] sm:$0xff]
    %v1002 = vld [vmem:[#allocation3 + $0xd8] sm:$0xff]
    %v1003 = vld [vmem:[#allocation3 + $0xe0] sm:$0xff]
    %v1004 = vld [vmem:[#allocation3 + $0xe8] sm:$0xff]
    %v1005 = vld [vmem:[#allocation3 + $0xf0] sm:$0xff]
    %v1006 = vld [vmem:[#allocation3 + $0xf8] sm:$0xff]
    %v1007 = vpack.c.bf16 %v911, %v907
    %v1008 = vpack.c.bf16 %v912, %v908
    %v1009 = vpack.c.bf16 %v913, %v909
    %v1010 = vpack.c.bf16 %v914, %v910
    %v1011 = vpack.c.bf16 %v919, %v915
    %v1012 = vpack.c.bf16 %v920, %v916
    %v1013 = vpack.c.bf16 %v921, %v917
    %v1014 = vpack.c.bf16 %v922, %v918
    %v1015 = vpack.c.bf16 %v927, %v923
    %v1016 = vpack.c.bf16 %v928, %v924
    %v1017 = vpack.c.bf16 %v929, %v925
    %v1018 = vpack.c.bf16 %v930, %v926
    %v1019 = vpack.c.bf16 %v935, %v931
    %v1020 = vpack.c.bf16 %v936, %v932
    %v1021 = vpack.c.bf16 %v937, %v933
    %v1022 = vpack.c.bf16 %v938, %v934
    %v1023 = vpack.c.bf16 %v943, %v939
    %v1024 = vpack.c.bf16 %v944, %v940
    %v1025 = vpack.c.bf16 %v945, %v941
    %v1026 = vpack.c.bf16 %v946, %v942
    %v1027 = vpack.c.bf16 %v951, %v947
    %v1028 = vpack.c.bf16 %v952, %v948
    %v1029 = vpack.c.bf16 %v953, %v949
    %v1030 = vpack.c.bf16 %v954, %v950
    %v1031 = vpack.c.bf16 %v959, %v955
    %v1032 = vpack.c.bf16 %v960, %v956
    %v1033 = vpack.c.bf16 %v961, %v957
    %v1034 = vpack.c.bf16 %v962, %v958
    %v1035 = vpack.c.bf16 %v967, %v963
    %v1036 = vpack.c.bf16 %v968, %v964
    %v1037 = vpack.c.bf16 %v969, %v965
    %v1038 = vpack.c.bf16 %v970, %v966
    %1039 = vmatprep.subr.bf16.mxu0 0
    %1040 = vmatpush1.bf16.msra.mxu0 %v975
    %1041 = vmatprep.subr.bf16.mxu0 0
    %1042 = vmatpush1.bf16.msra.mxu0 %v976
    %1043 = vmatprep.subr.bf16.mxu0 0
    %1044 = vmatpush1.bf16.msra.mxu0 %v977
    %1045 = vmatprep.subr.bf16.mxu0 0
    %1046 = vmatpush1.bf16.msra.mxu0 %v978
    %1047 = vmatprep.subr.bf16.mxu0 0
    %1048 = vmatpush1.bf16.msra.mxu0 %v979
    %1049 = vmatprep.subr.bf16.mxu0 0
    %1050 = vmatpush1.bf16.msra.mxu0 %v980
    %1051 = vmatprep.subr.bf16.mxu0 0
    %1052 = vmatpush1.bf16.msra.mxu0 %v981
    %1053 = vmatprep.subr.bf16.mxu0 0
    %1054 = vmatpush1.bf16.msra.mxu0 %v982
    %1055 = vmatprep.subr.bf16.mxu0 0
    %1056 = vmatpush1.bf16.msra.mxu0 %v983
    %1057 = vmatprep.subr.bf16.mxu0 0
    %1058 = vmatpush1.bf16.msra.mxu0 %v984
    %1059 = vmatprep.subr.bf16.mxu0 0
    %1060 = vmatpush1.bf16.msra.mxu0 %v985
    %1061 = vmatprep.subr.bf16.mxu0 0
    %1062 = vmatpush1.bf16.msra.mxu0 %v986
    %1063 = vmatprep.subr.bf16.mxu0 0
    %1064 = vmatpush1.bf16.msra.mxu0 %v987
    %1065 = vmatprep.subr.bf16.mxu0 0
    %1066 = vmatpush1.bf16.msra.mxu0 %v988
    %1067 = vmatprep.subr.bf16.mxu0 0
    %1068 = vmatpush1.bf16.msra.mxu0 %v989
    %1069 = vmatprep.subr.bf16.mxu0 0
    %1070 = vmatpush1.bf16.msra.mxu0 %v990
    %1071 = vmatprep.mubr.bf16.mxu0 %v1008
    %1072 = vmatmul.mubr.bf16.gmra.mrb[0].mxu0 %v1007
    %v1073 = vpop.f32.mrb[0].mxu0
    %v1074 = vadd.f32 0.0, %v1073
    %v1075 = vpop.f32.mrb[0].mxu0
    %v1076 = vpop.f32.mrb[0].mxu0
    %v1077 = vadd.f32 0.0, %v1076
    %v1078 = vpop.f32.mrb[0].mxu0
    %1079 = vmatprep.mubr.bf16.mxu0 %v1012
    %1080 = vmatmul.mubr.bf16.gmra.mrb[0].mxu0 %v1011
    %v1081 = vpop.f32.mrb[0].mxu0
    %v1082 = vadd.f32 0.0, %v1081
    %v1083 = vpop.f32.mrb[0].mxu0
    %v1084 = vpop.f32.mrb[0].mxu0
    %v1085 = vadd.f32 0.0, %v1084
    %v1086 = vpop.f32.mrb[0].mxu0
    %1087 = vmatprep.mubr.bf16.mxu0 %v1016
    %1088 = vmatmul.mubr.bf16.gmra.mrb[0].mxu0 %v1015
    %v1089 = vpop.f32.mrb[0].mxu0
    %v1090 = vadd.f32 0.0, %v1089
    %v1091 = vpop.f32.mrb[0].mxu0
    %v1092 = vpop.f32.mrb[0].mxu0
    %v1093 = vadd.f32 0.0, %v1092
    %v1094 = vpop.f32.mrb[0].mxu0
    %1095 = vmatprep.mubr.bf16.mxu0 %v1020
    %1096 = vmatmul.mubr.bf16.gmra.mrb[0].mxu0 %v1019
    %v1097 = vpop.f32.mrb[0].mxu0
    %v1098 = vadd.f32 0.0, %v1097
    %v1099 = vpop.f32.mrb[0].mxu0
    %v1100 = vpop.f32.mrb[0].mxu0
    %v1101 = vadd.f32 0.0, %v1100
    %v1102 = vpop.f32.mrb[0].mxu0
    %1103 = vmatprep.mubr.bf16.mxu0 %v1024
    %1104 = vmatmul.mubr.bf16.gmra.mrb[0].mxu0 %v1023
    %v1105 = vpop.f32.mrb[0].mxu0
    %v1106 = vadd.f32 0.0, %v1105
    %v1107 = vpop.f32.mrb[0].mxu0
    %v1108 = vpop.f32.mrb[0].mxu0
    %v1109 = vadd.f32 0.0, %v1108
    %v1110 = vpop.f32.mrb[0].mxu0
    %1111 = vmatprep.mubr.bf16.mxu0 %v1028
    %1112 = vmatmul.mubr.bf16.gmra.mrb[0].mxu0 %v1027
    %v1113 = vpop.f32.mrb[0].mxu0
    %v1114 = vadd.f32 0.0, %v1113
    %v1115 = vpop.f32.mrb[0].mxu0
    %v1116 = vpop.f32.mrb[0].mxu0
    %v1117 = vadd.f32 0.0, %v1116
    %v1118 = vpop.f32.mrb[0].mxu0
    %1119 = vmatprep.mubr.bf16.mxu0 %v1032
    %1120 = vmatmul.mubr.bf16.gmra.mrb[0].mxu0 %v1031
    %v1121 = vpop.f32.mrb[0].mxu0
    %v1122 = vadd.f32 0.0, %v1121
    %v1123 = vpop.f32.mrb[0].mxu0
    %v1124 = vpop.f32.mrb[0].mxu0
    %v1125 = vadd.f32 0.0, %v1124
    %v1126 = vpop.f32.mrb[0].mxu0
    %1127 = vmatprep.mubr.bf16.mxu0 %v1036
    %1128 = vmatmul.mubr.bf16.gmra.mrb[0].mxu0 %v1035
    %v1129 = vpop.f32.mrb[0].mxu0
    %v1130 = vadd.f32 0.0, %v1129
    %v1131 = vpop.f32.mrb[0].mxu0
    %v1132 = vpop.f32.mrb[0].mxu0
    %v1133 = vadd.f32 0.0, %v1132
    %v1134 = vpop.f32.mrb[0].mxu0
    %1135 = vdwg.mxu0
    %1136 = vmatprep.subr.bf16.mxu0 0
    %1137 = vmatpush1.bf16.msra.mxu0 %v991
    %1138 = vmatprep.subr.bf16.mxu0 0
    %1139 = vmatpush1.bf16.msra.mxu0 %v992
    %1140 = vmatprep.subr.bf16.mxu0 0
    %1141 = vmatpush1.bf16.msra.mxu0 %v993
    %1142 = vmatprep.subr.bf16.mxu0 0
    %1143 = vmatpush1.bf16.msra.mxu0 %v994
    %1144 = vmatprep.subr.bf16.mxu0 0
    %1145 = vmatpush1.bf16.msra.mxu0 %v995
    %1146 = vmatprep.subr.bf16.mxu0 0
    %1147 = vmatpush1.bf16.msra.mxu0 %v996
    %1148 = vmatprep.subr.bf16.mxu0 0
    %1149 = vmatpush1.bf16.msra.mxu0 %v997
    %1150 = vmatprep.subr.bf16.mxu0 0
    %1151 = vmatpush1.bf16.msra.mxu0 %v998
    %1152 = vmatprep.subr.bf16.mxu0 0
    %1153 = vmatpush1.bf16.msra.mxu0 %v999
    %1154 = vmatprep.subr.bf16.mxu0 0
    %1155 = vmatpush1.bf16.msra.mxu0 %v1000
    %1156 = vmatprep.subr.bf16.mxu0 0
    %1157 = vmatpush1.bf16.msra.mxu0 %v1001
    %1158 = vmatprep.subr.bf16.mxu0 0
    %1159 = vmatpush1.bf16.msra.mxu0 %v1002
    %1160 = vmatprep.subr.bf16.mxu0 0
    %1161 = vmatpush1.bf16.msra.mxu0 %v1003
    %1162 = vmatprep.subr.bf16.mxu0 0
    %1163 = vmatpush1.bf16.msra.mxu0 %v1004
    %1164 = vmatprep.subr.bf16.mxu0 0
    %1165 = vmatpush1.bf16.msra.mxu0 %v1005
    %1166 = vmatprep.subr.bf16.mxu0 0
    %1167 = vmatpush1.bf16.msra.mxu0 %v1006
    %1168 = vmatprep.mubr.bf16.mxu0 %v1010
    %1169 = vmatmul.mubr.bf16.gmra.mrb[0].mxu0 %v1009
    %v1170 = vpop.f32.mrb[0].mxu0
    %v1171 = vadd.f32 %v1074, %v1170
    %v1172 = vpop.f32.mrb[0].mxu0
    %v1173 = vpop.f32.mrb[0].mxu0
    %v1174 = vadd.f32 %v1077, %v1173
    %v1175 = vpop.f32.mrb[0].mxu0
    %1176 = vmatprep.mubr.bf16.mxu0 %v1014
    %1177 = vmatmul.mubr.bf16.gmra.mrb[0].mxu0 %v1013
    %v1178 = vpop.f32.mrb[0].mxu0
    %v1179 = vadd.f32 %v1082, %v1178
    %v1180 = vpop.f32.mrb[0].mxu0
    %v1181 = vpop.f32.mrb[0].mxu0
    %v1182 = vadd.f32 %v1085, %v1181
    %v1183 = vpop.f32.mrb[0].mxu0
    %1184 = vmatprep.mubr.bf16.mxu0 %v1018
    %1185 = vmatmul.mubr.bf16.gmra.mrb[0].mxu0 %v1017
    %v1186 = vpop.f32.mrb[0].mxu0
    %v1187 = vadd.f32 %v1090, %v1186
    %v1188 = vpop.f32.mrb[0].mxu0
    %v1189 = vpop.f32.mrb[0].mxu0
    %v1190 = vadd.f32 %v1093, %v1189
    %v1191 = vpop.f32.mrb[0].mxu0
    %1192 = vmatprep.mubr.bf16.mxu0 %v1022
    %1193 = vmatmul.mubr.bf16.gmra.mrb[0].mxu0 %v1021
    %v1194 = vpop.f32.mrb[0].mxu0
    %v1195 = vadd.f32 %v1098, %v1194
    %v1196 = vpop.f32.mrb[0].mxu0
    %v1197 = vpop.f32.mrb[0].mxu0
    %v1198 = vadd.f32 %v1101, %v1197
    %v1199 = vpop.f32.mrb[0].mxu0
    %1200 = vmatprep.mubr.bf16.mxu0 %v1026
    %1201 = vmatmul.mubr.bf16.gmra.mrb[0].mxu0 %v1025
    %v1202 = vpop.f32.mrb[0].mxu0
    %v1203 = vadd.f32 %v1106, %v1202
    %v1204 = vpop.f32.mrb[0].mxu0
    %v1205 = vpop.f32.mrb[0].mxu0
    %v1206 = vadd.f32 %v1109, %v1205
    %v1207 = vpop.f32.mrb[0].mxu0
    %1208 = vmatprep.mubr.bf16.mxu0 %v1030
    %1209 = vmatmul.mubr.bf16.gmra.mrb[0].mxu0 %v1029
    %v1210 = vpop.f32.mrb[0].mxu0
    %v1211 = vadd.f32 %v1114, %v1210
    %v1212 = vpop.f32.mrb[0].mxu0
    %v1213 = vpop.f32.mrb[0].mxu0
    %v1214 = vadd.f32 %v1117, %v1213
    %v1215 = vpop.f32.mrb[0].mxu0
    %1216 = vmatprep.mubr.bf16.mxu0 %v1034
    %1217 = vmatmul.mubr.bf16.gmra.mrb[0].mxu0 %v1033
    %v1218 = vpop.f32.mrb[0].mxu0
    %v1219 = vadd.f32 %v1122, %v1218
    %v1220 = vpop.f32.mrb[0].mxu0
    %v1221 = vpop.f32.mrb[0].mxu0
    %v1222 = vadd.f32 %v1125, %v1221
    %v1223 = vpop.f32.mrb[0].mxu0
    %1224 = vmatprep.mubr.bf16.mxu0 %v1038
    %1225 = vmatmul.mubr.bf16.gmra.mrb[0].mxu0 %v1037
    %v1226 = vpop.f32.mrb[0].mxu0
    %v1227 = vadd.f32 %v1130, %v1226
    %v1228 = vpop.f32.mrb[0].mxu0
    %v1229 = vpop.f32.mrb[0].mxu0
    %v1230 = vadd.f32 %v1133, %v1229
    %v1231 = vpop.f32.mrb[0].mxu0
    %1232 = vdwg.mxu0
    %v1233 = vadd.f32 %v1171, %v1174
    %v1234 = vadd.f32 %v1233, %v1179
    %v1235 = vadd.f32 %v1234, %v1182
    %v1236 = vadd.f32 %v1235, %v1187
    %v1237 = vadd.f32 %v1236, %v1190
    %v1238 = vadd.f32 %v1237, %v1195
    %v1239 = vadd.f32 %v1238, %v1198
    %v1240 = vadd.f32 %v1239, %v1203
    %v1241 = vadd.f32 %v1240, %v1206
    %v1242 = vadd.f32 %v1241, %v1211
    %v1243 = vadd.f32 %v1242, %v1214
    %v1244 = vadd.f32 %v1243, %v1219
    %v1245 = vadd.f32 %v1244, %v1222
    %v1246 = vadd.f32 %v1245, %v1227
    %v1247 = vadd.f32 %v1246, %v1230
    %v1248 = vrot.slane %v1247, 4
    %v1249 = vadd.f32 %v1247, %v1248
    %v1250 = vrot.slane %v1249, 2
    %v1251 = vadd.f32 %v1249, %v1250
    %v1252 = vrot.slane %v1251, 1
    %v1253 = vadd.f32 %v1251, %v1252
    %v1254 = vmul.f32 %v1171, %v1171
    %v1255 = vmul.f32 %v1174, %v1174
    %v1256 = vmul.f32 %v1179, %v1179
    %v1257 = vmul.f32 %v1182, %v1182
    %v1258 = vmul.f32 %v1187, %v1187
    %v1259 = vmul.f32 %v1190, %v1190
    %v1260 = vmul.f32 %v1195, %v1195
    %v1261 = vmul.f32 %v1198, %v1198
    %v1262 = vmul.f32 %v1203, %v1203
    %v1263 = vmul.f32 %v1206, %v1206
    %v1264 = vmul.f32 %v1211, %v1211
    %v1265 = vmul.f32 %v1214, %v1214
    %v1266 = vmul.f32 %v1219, %v1219
    %v1267 = vmul.f32 %v1222, %v1222
    %v1268 = vmul.f32 %v1227, %v1227
    %v1269 = vmul.f32 %v1230, %v1230
    %v1270 = vadd.f32 %v1254, %v1255
    %v1271 = vadd.f32 %v1270, %v1256
    %v1272 = vadd.f32 %v1271, %v1257
    %v1273 = vadd.f32 %v1272, %v1258
    %v1274 = vadd.f32 %v1273, %v1259
    %v1275 = vadd.f32 %v1274, %v1260
    %v1276 = vadd.f32 %v1275, %v1261
    %v1277 = vadd.f32 %v1276, %v1262
    %v1278 = vadd.f32 %v1277, %v1263
    %v1279 = vadd.f32 %v1278, %v1264
    %v1280 = vadd.f32 %v1279, %v1265
    %v1281 = vadd.f32 %v1280, %v1266
    %v1282 = vadd.f32 %v1281, %v1267
    %v1283 = vadd.f32 %v1282, %v1268
    %v1284 = vadd.f32 %v1283, %v1269
    %v1285 = vrot.slane %v1284, 4
    %v1286 = vadd.f32 %v1284, %v1285
    %v1287 = vrot.slane %v1286, 2
    %v1288 = vadd.f32 %v1286, %v1287
    %v1289 = vrot.slane %v1288, 1
    %v1290 = vadd.f32 %v1288, %v1289
    %v1291 = vmul.f32 %v1253, 0.0078125
    %v1292 = vmul.f32 %v1290, 0.0078125
    %v1293 = vmul.f32 %v1291, %v1291
    %v1294 = vsub.f32 %v1292, %v1293
    %v1295 = vld [vmem:[#allocation3 + $0x100] sm:$0x1]
    %v1296 = vunpack.c.l.bf16 %v1295
    %v1297 = vadd.f32 %v1294, 1e-05
    %v1298 = vrsqrt.pop %v1297
    %v1299 = vmul.f32 %v1296, %v1298
    %v1300 = vsub.f32 %v1171, %v1291
    %v1301 = vsub.f32 %v1174, %v1291
    %v1302 = vsub.f32 %v1179, %v1291
    %v1303 = vsub.f32 %v1182, %v1291
    %v1304 = vsub.f32 %v1187, %v1291
    %v1305 = vsub.f32 %v1190, %v1291
    %v1306 = vsub.f32 %v1195, %v1291
    %v1307 = vsub.f32 %v1198, %v1291
    %v1308 = vsub.f32 %v1203, %v1291
    %v1309 = vsub.f32 %v1206, %v1291
    %v1310 = vsub.f32 %v1211, %v1291
    %v1311 = vsub.f32 %v1214, %v1291
    %v1312 = vsub.f32 %v1219, %v1291
    %v1313 = vsub.f32 %v1222, %v1291
    %v1314 = vsub.f32 %v1227, %v1291
    %v1315 = vsub.f32 %v1230, %v1291
    %v1316 = vlaneseq
    %v1317 = vshrl.u32 %v1316, 7
    %v1318 = vsub.s32 0, %v1317
    %v1319 = vrot.slane %v1299, %v1318
    %v1320 = vmul.f32 %v1300, %v1319
    %v1321 = vmul.f32 %v1301, %v1319
    %v1322 = vmul.f32 %v1302, %v1319
    %v1323 = vmul.f32 %v1303, %v1319
    %v1324 = vmul.f32 %v1304, %v1319
    %v1325 = vmul.f32 %v1305, %v1319
    %v1326 = vmul.f32 %v1306, %v1319
    %v1327 = vmul.f32 %v1307, %v1319
    %v1328 = vmul.f32 %v1308, %v1319
    %v1329 = vmul.f32 %v1309, %v1319
    %v1330 = vmul.f32 %v1310, %v1319
    %v1331 = vmul.f32 %v1311, %v1319
    %v1332 = vmul.f32 %v1312, %v1319
    %v1333 = vmul.f32 %v1313, %v1319
    %v1334 = vmul.f32 %v1314, %v1319
    %v1335 = vmul.f32 %v1315, %v1319
    %v1336 = vlaneseq
    %v1337 = vshrl.u32 %v1336, 7
    %v1338 = vsub.s32 1, %v1337
    %v1339 = vrot.slane %v1296, %v1338
    %v1340 = vadd.f32 %v1320, %v1339
    %v1341 = vadd.f32 %v1321, %v1339
    %v1342 = vadd.f32 %v1322, %v1339
    %v1343 = vadd.f32 %v1323, %v1339
    %v1344 = vadd.f32 %v1324, %v1339
    %v1345 = vadd.f32 %v1325, %v1339
    %v1346 = vadd.f32 %v1326, %v1339
    %v1347 = vadd.f32 %v1327, %v1339
    %v1348 = vadd.f32 %v1328, %v1339
    %v1349 = vadd.f32 %v1329, %v1339
    %v1350 = vadd.f32 %v1330, %v1339
    %v1351 = vadd.f32 %v1331, %v1339
    %v1352 = vadd.f32 %v1332, %v1339
    %v1353 = vadd.f32 %v1333, %v1339
    %v1354 = vadd.f32 %v1334, %v1339
    %v1355 = vadd.f32 %v1335, %v1339
    %v1356 = vtanh.pop %v1340
    %v1357 = vtanh.pop %v1341
    %v1358 = vtanh.pop %v1342
    %v1359 = vtanh.pop %v1343
    %v1360 = vtanh.pop %v1344
    %v1361 = vtanh.pop %v1345
    %v1362 = vtanh.pop %v1346
    %v1363 = vtanh.pop %v1347
    %v1364 = vtanh.pop %v1348
    %v1365 = vtanh.pop %v1349
    %v1366 = vtanh.pop %v1350
    %v1367 = vtanh.pop %v1351
    %v1368 = vtanh.pop %v1352
    %v1369 = vtanh.pop %v1353
    %v1370 = vtanh.pop %v1354
    %v1371 = vtanh.pop %v1355
    %1372 = vst [vmem:[#allocation8] sm:$0xff] %v1356
    %1373 = vst [vmem:[#allocation8 + $0x8] sm:$0xff] %v1357
    %1374 = vst [vmem:[#allocation8 + $0x10] sm:$0xff] %v1358
    %1375 = vst [vmem:[#allocation8 + $0x18] sm:$0xff] %v1359
    %1376 = vst [vmem:[#allocation8 + $0x20] sm:$0xff] %v1360
    %1377 = vst [vmem:[#allocation8 + $0x28] sm:$0xff] %v1361
    %1378 = vst [vmem:[#allocation8 + $0x30] sm:$0xff] %v1362
    %1379 = vst [vmem:[#allocation8 + $0x38] sm:$0xff] %v1363
    %1380 = vst [vmem:[#allocation8 + $0x40] sm:$0xff] %v1364
    %1381 = vst [vmem:[#allocation8 + $0x48] sm:$0xff] %v1365
    %1382 = vst [vmem:[#allocation8 + $0x50] sm:$0xff] %v1366
    %1383 = vst [vmem:[#allocation8 + $0x58] sm:$0xff] %v1367
    %1384 = vst [vmem:[#allocation8 + $0x60] sm:$0xff] %v1368
    %1385 = vst [vmem:[#allocation8 + $0x68] sm:$0xff] %v1369
    %1386 = vst [vmem:[#allocation8 + $0x70] sm:$0xff] %v1370
    %1387 = vst [vmem:[#allocation8 + $0x78] sm:$0xff] %v1371
    // Predicated region
    $region14: #{mlp_forward.1} parent=1 // pred_check
      _
    $region15: #{mlp_forward.1} parent=1 // pred_check_branch
      %1389 = sbr.rel (0) target = $region17
    $region16: #{mlp_forward.1} parent=1 // pred_region
      %s1391 = ssub.s32 2048, 2048
      %1392 = vsyncadd [#allocation7], %s1391
      %s1393 = sshll.u32 [#allocation8], 4
      %s1394 = int_to_ptr.vmem [resolvable:$true] %s1393
      %1399 = dma.vmem_to_hbm [thread:$0]  %s1394, 2048, %s3, [#allocation7], 128, 128, 8
    $region17: #{mlp_forward.1} parent=1 // pred_fallthru
      _
    // Predicated region
    $region18: #{mlp_forward.1} parent=1 // pred_check
      _
    $region19: #{mlp_forward.1} parent=1 // pred_check_branch
      %1401 = sbr.rel (0) target = $region21
    $region20: #{mlp_forward.1} parent=1 // pred_region
      %1402 = dma.done [#allocation7], 2048
    $region21: #{mlp_forward.1} parent=1 // pred_fallthru
      _
    %1403 = vsyncpa [#allocation6], 1
    %1404 = vsyncpa [#allocation7], 1
  %1405 = vsyncmov [#allocation4]
  %s1406 = vpop.sfrf %1405
  %p1407 = scmp.eq.s32.totalorder %s1406, 0
  %p1408 = pneg %p1407
  %1410 = shalt.err (%p1408)
  %s1411 = scalar_lea.sflag [#allocation4], 1
  %1412 = vsyncmov %s1411
  %s1413 = vpop.sfrf %1412
  %p1414 = scmp.eq.s32.totalorder %s1413, 0
  %p1415 = pneg %p1414
  %1417 = shalt.err (%p1415)

</llo_original>
